<compile_context>
chip_gen: v6e
topology: v6e:2x2x1
jax: 0.10.0
libtpu: 0.0.40
codegen_flags: <defaults>
</compile_context>

<pallas_src>
import jax
import jax.numpy as jnp
from jax.experimental import pallas as pl
from jax.experimental.pallas import tpu as pltpu

LN_EPS = 1e-5  # PyTorch LayerNorm default eps
_HIGHEST = jax.lax.Precision.HIGHEST


# --------------------------------------------------------------------------- kernels
def _pair_update_kernel(xi_ref, xjT_ref, z_ref, zp_ref, lower_ref, upper_ref,
                        wT_ref, b_ref, gz_ref, bz_ref, o_ref):
    f32 = jnp.float32

    xi = xi_ref[0].astype(f32)       # [TM, 3]  rows of x_prev for this i-tile
    xjT = xjT_ref[0].astype(f32)     # [3, TN]  cols of x_prev (transposed) for this j-tile

    # Lane-dense squared pair distances: d2[i, j] = sum_d (xi[i, d] - xj[j, d])^2.
    # Unrolled over the 3 coordinates; each term is a (TM,1)-(1,TN) broadcast.
    d2 = None
    for d in range(3):
        dd = xi[:, d:d + 1] - xjT[d:d + 1, :]            # [TM, TN]
        dd = dd * dd
        d2 = dd if d2 is None else d2 + dd               # [TM, TN]

    # Distogram one-hot (strict inequalities, f32 like the f32 reference), then
    # Linear(num_bins -> c_z) on the MXU. The one-hot dtype follows W^T's dtype
    # (bf16 for bf16 activations: 0/1 exact, accumulation stays f32).
    onehot = jnp.logical_and(d2[:, :, None] > lower_ref[...],
                             d2[:, :, None] < upper_ref[...]).astype(wT_ref.dtype)  # [TM,TN,B]
    tm, tn, nb = onehot.shape
    c_z = o_ref.shape[-1]
    # TN % 8 == 0 (or TN == N_res), so this leading-dims collapse is layout-free.
    emb = jnp.dot(onehot.reshape(tm * tn, nb), wT_ref[...],
                  preferred_element_type=f32, precision=_HIGHEST)
    emb = emb.reshape(tm, tn, c_z)

    # Single f32 accumulator: z + embed(d) + bias, then += LayerNorm(z_prev).
    acc = z_ref[0].astype(f32) + emb + b_ref[...].astype(f32)

    zp = zp_ref[0].astype(f32)                            # [TM, TN, c_z]
    mu = jnp.mean(zp, axis=-1, keepdims=True)
    xc = zp - mu
    var = jnp.mean(xc * xc, axis=-1, keepdims=True)
    acc = acc + xc * jax.lax.rsqrt(var + LN_EPS) * gz_ref[...].astype(f32) \
              + bz_ref[...].astype(f32)

    o_ref[0] = acc.astype(o_ref.dtype)


def _msa_update_kernel(m_ref, m0_ref, gm_ref, bm_ref, o_ref):
    # m[:, 0] += LayerNorm(m0_prev). Only the cluster-row-0 block is read and
    # written; the rest of m is preserved through input_output_aliases (the
    # caller must donate m at the jit boundary for the copy to be elided).
    f32 = jnp.float32
    m0 = m0_ref[0].astype(f32)                            # [N_res, c_m]
    mu = jnp.mean(m0, axis=-1, keepdims=True)
    xc = m0 - mu
    var = jnp.mean(xc * xc, axis=-1, keepdims=True)
    mn = xc * jax.lax.rsqrt(var + LN_EPS) * gm_ref[...].astype(f32) + bm_ref[...].astype(f32)
    o_ref[0, 0] = (m_ref[0, 0].astype(f32) + mn).astype(o_ref.dtype)


# --------------------------------------------------------------------------- tiling
def _pair_tiles_and_vmem(n_res, c_z, num_bins, z_itemsize, onehot_itemsize,
                         tile_m, tile_n):
    """Pick (TM, TN) and a scoped-VMEM limit from the physical VMEM capacity."""
    try:
        vmem_cap = int(getattr(pltpu.get_tpu_info(), "vmem_capacity_bytes", 64 << 20))
    except Exception:
        vmem_cap = 64 << 20   # conservative fallback: v7x per-core VMEM

    tn = min(tile_n, n_res)   # lane dim of the transposed-x block: 128-aligned or == n_res
    tm = min(tile_m, n_res)

    lane_pad_bins = -(-num_bins // 128) * 128             # one-hot lanes pad to 128

    def vmem_estimate(tm_):
        blk = tm_ * tn * c_z * z_itemsize                  # one z-stream block
        onehot = tm_ * tn * lane_pad_bins * onehot_itemsize
        f32_tmp = 4 * tm_ * tn * c_z * 4                   # zp, xc, emb, acc (f32)
        return 3 * 2 * blk + 2 * onehot + f32_tmp + (2 << 20)

    # Shrink TM (TN stays lane-legal) until >= 15% of physical VMEM is headroom.
    while vmem_estimate(tm) > int(0.85 * vmem_cap) and tm >= 16:
        tm = max(8, (tm // 2 // 8) * 8)

    vmem_limit = int(min(max(vmem_estimate(tm), 32 << 20), int(0.9 * vmem_cap)))
    return tm, tn, vmem_limit


# --------------------------------------------------------------------------- wrapper
def recycling_embedder_forward(m, z, m0_prev, z_prev, x_prev, params,
                               tile_m=128, tile_n=128):
    batch, n_clust, n_res, c_m = m.shape
    c_z = z.shape[-1]
    num_bins = params["lower"].shape[0]

    # Distogram-matmul dtype policy (see header): bf16 only for bf16 activations.
    mm_dtype = jnp.bfloat16 if z.dtype == jnp.bfloat16 else jnp.float32

    tm, tn, vmem_limit = _pair_tiles_and_vmem(
        n_res, c_z, num_bins, z.dtype.itemsize, jnp.dtype(mm_dtype).itemsize,
        tile_m, tile_n)
    gi = pl.cdiv(n_res, tm)
    gj = pl.cdiv(n_res, tn)

    # Parameter / buffer plumbing (cheap glue, plain JAX).
    xjT = jnp.swapaxes(x_prev, -1, -2)                    # [b, 3, N]
    lower3 = params["lower"].reshape(1, 1, num_bins).astype(jnp.float32)
    upper3 = params["upper"].reshape(1, 1, num_bins).astype(jnp.float32)
    wT = params["linear_w"].T.astype(mm_dtype)            # [num_bins, c_z] (PyTorch weight is [out, in])
    b3 = params["linear_b"].reshape(1, 1, c_z).astype(jnp.float32)
    gz3 = params["ln_z_w"].reshape(1, 1, c_z).astype(jnp.float32)
    bz3 = params["ln_z_b"].reshape(1, 1, c_z).astype(jnp.float32)
    gm2 = params["ln_m_w"].reshape(1, c_m).astype(jnp.float32)
    bm2 = params["ln_m_b"].reshape(1, c_m).astype(jnp.float32)

    z_out = pl.pallas_call(
        _pair_update_kernel,
        out_shape=jax.ShapeDtypeStruct((batch, n_res, n_res, c_z), z.dtype),
        grid_spec=pltpu.PrefetchScalarGridSpec(
            num_scalar_prefetch=0,
            grid=(batch, gi, gj),
            in_specs=[
                pl.BlockSpec((1, tm, 3), lambda b, i, j: (b, i, 0)),            # x rows
                pl.BlockSpec((1, 3, tn), lambda b, i, j: (b, 0, j)),            # x cols (transposed)
                pl.BlockSpec((1, tm, tn, c_z), lambda b, i, j: (b, i, j, 0)),   # z
                pl.BlockSpec((1, tm, tn, c_z), lambda b, i, j: (b, i, j, 0)),   # z_prev
                pl.BlockSpec((1, 1, num_bins), lambda b, i, j: (0, 0, 0)),      # lower
                pl.BlockSpec((1, 1, num_bins), lambda b, i, j: (0, 0, 0)),      # upper
                pl.BlockSpec((num_bins, c_z), lambda b, i, j: (0, 0)),          # W^T
                pl.BlockSpec((1, 1, c_z), lambda b, i, j: (0, 0, 0)),           # bias
                pl.BlockSpec((1, 1, c_z), lambda b, i, j: (0, 0, 0)),           # ln_z gamma
                pl.BlockSpec((1, 1, c_z), lambda b, i, j: (0, 0, 0)),           # ln_z beta
            ],
            out_specs=pl.BlockSpec((1, tm, tn, c_z), lambda b, i, j: (b, i, j, 0)),
        ),
        compiler_params=pltpu.CompilerParams(
            dimension_semantics=("parallel", "parallel", "parallel"),
            vmem_limit_bytes=vmem_limit,
        ),
    )(x_prev, xjT, z, z_prev, lower3, upper3, wT, b3, gz3, bz3)

    # MSA path: one grid step per batch; only cluster-row 0 is touched; the rest
    # of m stays in place via input_output_aliases (requires m to be donated).
    m_out = pl.pallas_call(
        _msa_update_kernel,
        out_shape=jax.ShapeDtypeStruct(m.shape, m.dtype),
        grid_spec=pltpu.PrefetchScalarGridSpec(
            num_scalar_prefetch=0,
            grid=(batch,),
            in_specs=[
                pl.BlockSpec((1, 1, n_res, c_m), lambda b: (b, 0, 0, 0)),   # m row 0
                pl.BlockSpec((1, n_res, c_m), lambda b: (b, 0, 0)),         # m0_prev
                pl.BlockSpec((1, c_m), lambda b: (0, 0)),                   # ln_m gamma
                pl.BlockSpec((1, c_m), lambda b: (0, 0)),                   # ln_m beta
            ],
            out_specs=pl.BlockSpec((1, 1, n_res, c_m), lambda b: (b, 0, 0, 0)),
        ),
        input_output_aliases={0: 0},
        compiler_params=pltpu.CompilerParams(
            dimension_semantics=("parallel",),
        ),
    )(m, m0_prev, gm2, bm2)

    return m_out, z_out


# Jitted entry point: m (arg 0) is donated so the MSA path's in/out aliasing
# actually elides the full copy of m instead of XLA inserting a defensive one.
recycling_embedder_forward_jit = jax.jit(recycling_embedder_forward,
                                         donate_argnums=(0,))


# --------------------------------------------------------------------------- reference
def _reference_forward(m, z, m0_prev, z_prev, x_prev, params):
    diff = x_prev[:, :, None, :] - x_prev[:, None, :, :]
    d2 = jnp.sum(diff ** 2, axis=-1, keepdims=True)
    onehot = jnp.logical_and(d2 > params["lower"], d2 < params["upper"]).astype(x_prev.dtype)
    d = jnp.dot(onehot, params["linear_w"].T, precision=_HIGHEST) + params["linear_b"]

    def ln(x, g, b):
        mu = x.mean(-1, keepdims=True)
        var = ((x - mu) ** 2).mean(-1, keepdims=True)
        return (x - mu) / jnp.sqrt(var + LN_EPS) * g + b

    z_update = ln(z_prev, params["ln_z_w"], params["ln_z_b"])
    m0_update = ln(m0_prev, params["ln_m_w"], params["ln_m_b"])
    m_out = m.at[:, 0].add(m0_update)
    z_out = z + z_update + d
    return m_out, z_out


# --------------------------------------------------------------------------- main
if __name__ == "__main__":
    # Small shapes consistent with the module's forward signature.
    batch, n_clust, n_res = 2, 4, 8
    c_m, c_z = 32, 16
    min_bin, max_bin, num_bins, inf = 3.25, 20.75, 15, 1e8

    key = jax.random.PRNGKey(0)
    ks = jax.random.split(key, 10)

    # Deterministic parameter init (shapes from __init__).
    linear_w = jax.random.normal(ks[0], (c_z, num_bins), jnp.float32) * 0.1
    linear_b = jax.random.normal(ks[1], (c_z,), jnp.float32) * 0.1
    ln_m_w = 1.0 + 0.05 * jax.random.normal(ks[2], (c_m,), jnp.float32)
    ln_m_b = 0.05 * jax.random.normal(ks[3], (c_m,), jnp.float32)
    ln_z_w = 1.0 + 0.05 * jax.random.normal(ks[4], (c_z,), jnp.float32)
    ln_z_b = 0.05 * jax.random.normal(ks[5], (c_z,), jnp.float32)

    # Distogram bin buffers (module's _initialize_buffers).
    bins = jnp.linspace(min_bin, max_bin, num_bins, dtype=jnp.float32)
    lower = bins ** 2
    upper = jnp.roll(lower, -1).at[-1].set(inf)

    params = dict(linear_w=linear_w, linear_b=linear_b,
                  ln_m_w=ln_m_w, ln_m_b=ln_m_b,
                  ln_z_w=ln_z_w, ln_z_b=ln_z_b,
                  lower=lower, upper=upper)

    # Inputs.
    m = jax.random.normal(ks[6], (batch, n_clust, n_res, c_m), jnp.float32)
    z = jax.random.normal(ks[7], (batch, n_res, n_res, c_z), jnp.float32)
    m0_prev = jax.random.normal(ks[8], (batch, n_res, c_m), jnp.float32)
    z_prev = jax.random.normal(ks[9], (batch, n_res, n_res, c_z), jnp.float32)
    x_prev = jax.random.normal(jax.random.PRNGKey(42), (batch, n_res, 3), jnp.float32) * 8.0

    # Reference first: m is donated into the jitted kernel call afterwards.
    m_ref, z_ref = _reference_forward(m, z, m0_prev, z_prev, x_prev, params)
    m_ref = jax.block_until_ready(m_ref)
    z_ref = jax.block_until_ready(z_ref)

    m_out, z_out = recycling_embedder_forward_jit(m, z, m0_prev, z_prev, x_prev, params)
    m_out = jax.block_until_ready(m_out)
    z_out = jax.block_until_ready(z_out)

    assert m_out.shape == (batch, n_clust, n_res, c_m) and m_out.dtype == jnp.float32
    assert z_out.shape == (batch, n_res, n_res, c_z) and z_out.dtype == jnp.float32
    assert jnp.allclose(m_out, m_ref, atol=1e-3, rtol=1e-3), "MSA update mismatch"
    assert jnp.allclose(z_out, z_ref, atol=1e-3, rtol=1e-3), "Pair update mismatch"

    print("KERNEL_OK")
</pallas_src>

<mosaic_0001>
module attributes {stable_mosaic.version = 11 : i64} {
  func.func @_msa_update_kernel(%arg0: i32, %arg1: memref<1x1x8x32xf32, #tpu.memory_space<vmem>>, %arg2: memref<1x8x32xf32, #tpu.memory_space<vmem>>, %arg3: memref<1x32xf32, #tpu.memory_space<vmem>>, %arg4: memref<1x32xf32, #tpu.memory_space<vmem>>, %arg5: memref<1x1x8x32xf32, #tpu.memory_space<vmem>>) attributes {dimension_semantics = [#tpu.dimension_semantics<parallel>], iteration_bounds = array<i64: 2>, scalar_prefetch = 0 : i64, scratch_operands = 0 : i64, tpu.core_type = #tpu.core_type<tc>, window_params = [{transform_indices = @transform_0, window_bounds = array<i64: 1, 1, 8, 32>}, {transform_indices = @transform_1, window_bounds = array<i64: 1, 8, 32>}, {pipeline_mode = #tpu.pipeline_mode<synchronous>, transform_indices = @transform_2, window_bounds = array<i64: 1, 32>}, {pipeline_mode = #tpu.pipeline_mode<synchronous>, transform_indices = @transform_3, window_bounds = array<i64: 1, 32>}, {transform_indices = @transform_4, window_bounds = array<i64: 1, 1, 8, 32>}]} {
    %c0 = arith.constant 0 : index
    %c0_0 = arith.constant 0 : index
    %c0_1 = arith.constant 0 : index
    %0 = vector.load %arg2[%c0, %c0_0, %c0_1] : memref<1x8x32xf32, #tpu.memory_space<vmem>>, vector<1x8x32xf32>
    %1 = vector.shape_cast %0 : vector<1x8x32xf32> to vector<8x32xf32>
    %cst = arith.constant dense<0.000000e+00> : vector<8xf32>
    %2 = vector.multi_reduction <add>, %1, %cst [1] : vector<8x32xf32> to vector<8xf32>
    %3 = vector.shape_cast %2 : vector<8xf32> to vector<8x1xf32>
    %cst_2 = arith.constant 3.200000e+01 : f32
    %4 = vector.broadcast %cst_2 : f32 to vector<8x1xf32>
    %5 = arith.divf %3, %4 : vector<8x1xf32>
    %6 = vector.broadcast %5 : vector<8x1xf32> to vector<8x32xf32>
    %7 = arith.subf %1, %6 : vector<8x32xf32>
    %8 = arith.mulf %7, %7 : vector<8x32xf32>
    %cst_3 = arith.constant dense<0.000000e+00> : vector<8xf32>
    %9 = vector.multi_reduction <add>, %8, %cst_3 [1] : vector<8x32xf32> to vector<8xf32>
    %10 = vector.shape_cast %9 : vector<8xf32> to vector<8x1xf32>
    %cst_4 = arith.constant 3.200000e+01 : f32
    %11 = vector.broadcast %cst_4 : f32 to vector<8x1xf32>
    %12 = arith.divf %10, %11 : vector<8x1xf32>
    %cst_5 = arith.constant 9.99999974E-6 : f32
    %13 = vector.broadcast %cst_5 : f32 to vector<8x1xf32>
    %14 = arith.addf %12, %13 : vector<8x1xf32>
    %15 = math.rsqrt %14 : vector<8x1xf32>
    %16 = vector.broadcast %15 : vector<8x1xf32> to vector<8x32xf32>
    %17 = arith.mulf %7, %16 : vector<8x32xf32>
    %c0_6 = arith.constant 0 : index
    %c0_7 = arith.constant 0 : index
    %18 = vector.load %arg3[%c0_6, %c0_7] : memref<1x32xf32, #tpu.memory_space<vmem>>, vector<1x32xf32>
    %19 = vector.broadcast %18 : vector<1x32xf32> to vector<8x32xf32>
    %20 = arith.mulf %17, %19 : vector<8x32xf32>
    %c0_8 = arith.constant 0 : index
    %c0_9 = arith.constant 0 : index
    %21 = vector.load %arg4[%c0_8, %c0_9] : memref<1x32xf32, #tpu.memory_space<vmem>>, vector<1x32xf32>
    %22 = vector.broadcast %21 : vector<1x32xf32> to vector<8x32xf32>
    %23 = arith.addf %20, %22 : vector<8x32xf32>
    %c0_10 = arith.constant 0 : index
    %c0_11 = arith.constant 0 : index
    %c0_12 = arith.constant 0 : index
    %c0_13 = arith.constant 0 : index
    %24 = vector.load %arg1[%c0_10, %c0_11, %c0_12, %c0_13] : memref<1x1x8x32xf32, #tpu.memory_space<vmem>>, vector<1x1x8x32xf32>
    %25 = vector.shape_cast %24 : vector<1x1x8x32xf32> to vector<8x32xf32>
    %26 = arith.addf %25, %23 : vector<8x32xf32>
    %c0_14 = arith.constant 0 : index
    %c0_15 = arith.constant 0 : index
    %c0_16 = arith.constant 0 : index
    %c0_17 = arith.constant 0 : index
    %27 = vector.load %arg5[%c0_14, %c0_15, %c0_16, %c0_17] : memref<1x1x8x32xf32, #tpu.memory_space<vmem>>, vector<1x1x8x32xf32>
    %28 = vector.shape_cast %27 : vector<1x1x8x32xf32> to vector<8x32xf32>
    %29 = vector.shape_cast %26 : vector<8x32xf32> to vector<1x1x8x32xf32>
    tpu.vector_store %arg5[%c0_14, %c0_15, %c0_16, %c0_17], %29 {strides = array<i32>} : memref<1x1x8x32xf32, #tpu.memory_space<vmem>>, vector<1x1x8x32xf32>,
    return
  }
  func.func @transform_0(%arg0: i32) -> (i32, i32, i32, i32) {
    %c0_i32 = arith.constant 0 : i32
    %c0_i32_0 = arith.constant 0 : i32
    %c0_i32_1 = arith.constant 0 : i32
    %c0_i32_2 = arith.constant 0 : i32
    return %arg0, %c0_i32, %c0_i32_0, %c0_i32_1 : i32, i32, i32, i32
  }
  func.func @transform_1(%arg0: i32) -> (i32, i32, i32) {
    %c0_i32 = arith.constant 0 : i32
    %c0_i32_0 = arith.constant 0 : i32
    %c0_i32_1 = arith.constant 0 : i32
    return %arg0, %c0_i32, %c0_i32_0 : i32, i32, i32
  }
  func.func @transform_2(%arg0: i32) -> (i32, i32) {
    %c0_i32 = arith.constant 0 : i32
    %c0_i32_0 = arith.constant 0 : i32
    %c0_i32_1 = arith.constant 0 : i32
    return %c0_i32, %c0_i32_0 : i32, i32
  }
  func.func @transform_3(%arg0: i32) -> (i32, i32) {
    %c0_i32 = arith.constant 0 : i32
    %c0_i32_0 = arith.constant 0 : i32
    %c0_i32_1 = arith.constant 0 : i32
    return %c0_i32, %c0_i32_0 : i32, i32
  }
  func.func @transform_4(%arg0: i32) -> (i32, i32, i32, i32) {
    %c0_i32 = arith.constant 0 : i32
    %c0_i32_0 = arith.constant 0 : i32
    %c0_i32_1 = arith.constant 0 : i32
    %c0_i32_2 = arith.constant 0 : i32
    return %arg0, %c0_i32, %c0_i32_0, %c0_i32_1 : i32, i32, i32, i32
  }
}

module attributes {stable_mosaic.version = 11 : i64} {
  func.func @_pair_update_kernel(%arg0: i32, %arg1: i32, %arg2: i32, %arg3: memref<1x8x3xf32, #tpu.memory_space<vmem>>, %arg4: memref<1x3x8xf32, #tpu.memory_space<vmem>>, %arg5: memref<1x8x8x16xf32, #tpu.memory_space<vmem>>, %arg6: memref<1x8x8x16xf32, #tpu.memory_space<vmem>>, %arg7: memref<1x1x15xf32, #tpu.memory_space<vmem>>, %arg8: memref<1x1x15xf32, #tpu.memory_space<vmem>>, %arg9: memref<15x16xf32, #tpu.memory_space<vmem>>, %arg10: memref<1x1x16xf32, #tpu.memory_space<vmem>>, %arg11: memref<1x1x16xf32, #tpu.memory_space<vmem>>, %arg12: memref<1x1x16xf32, #tpu.memory_space<vmem>>, %arg13: memref<1x8x8x16xf32, #tpu.memory_space<vmem>>) attributes {dimension_semantics = [#tpu.dimension_semantics<parallel>, #tpu.dimension_semantics<parallel>, #tpu.dimension_semantics<parallel>], iteration_bounds = array<i64: 2, 1, 1>, scalar_prefetch = 0 : i64, scratch_operands = 0 : i64, tpu.core_type = #tpu.core_type<tc>, window_params = [{transform_indices = @transform_0, window_bounds = array<i64: 1, 8, 3>}, {transform_indices = @transform_1, window_bounds = array<i64: 1, 3, 8>}, {transform_indices = @transform_2, window_bounds = array<i64: 1, 8, 8, 16>}, {transform_indices = @transform_3, window_bounds = array<i64: 1, 8, 8, 16>}, {pipeline_mode = #tpu.pipeline_mode<synchronous>, transform_indices = @transform_4, window_bounds = array<i64: 1, 1, 15>}, {pipeline_mode = #tpu.pipeline_mode<synchronous>, transform_indices = @transform_5, window_bounds = array<i64: 1, 1, 15>}, {pipeline_mode = #tpu.pipeline_mode<synchronous>, transform_indices = @transform_6, window_bounds = array<i64: 15, 16>}, {pipeline_mode = #tpu.pipeline_mode<synchronous>, transform_indices = @transform_7, window_bounds = array<i64: 1, 1, 16>}, {pipeline_mode = #tpu.pipeline_mode<synchronous>, transform_indices = @transform_8, window_bounds = array<i64: 1, 1, 16>}, {pipeline_mode = #tpu.pipeline_mode<synchronous>, transform_indices = @transform_9, window_bounds = array<i64: 1, 1, 16>}, {transform_indices = @transform_10, window_bounds = array<i64: 1, 8, 8, 16>}]} {
    %c0 = arith.constant 0 : index
    %c0_0 = arith.constant 0 : index
    %c0_1 = arith.constant 0 : index
    %0 = vector.load %arg3[%c0, %c0_0, %c0_1] : memref<1x8x3xf32, #tpu.memory_space<vmem>>, vector<1x8x3xf32>
    %1 = vector.shape_cast %0 : vector<1x8x3xf32> to vector<8x3xf32>
    %c0_2 = arith.constant 0 : index
    %c0_3 = arith.constant 0 : index
    %c0_4 = arith.constant 0 : index
    %2 = vector.load %arg4[%c0_2, %c0_3, %c0_4] : memref<1x3x8xf32, #tpu.memory_space<vmem>>, vector<1x3x8xf32>
    %3 = vector.shape_cast %2 : vector<1x3x8xf32> to vector<3x8xf32>
    %4 = vector.extract_strided_slice %1 {offsets = [0, 0], sizes = [8, 1], strides = [1, 1]} : vector<8x3xf32> to vector<8x1xf32>
    %5 = vector.extract_strided_slice %3 {offsets = [0, 0], sizes = [1, 8], strides = [1, 1]} : vector<3x8xf32> to vector<1x8xf32>
    %6 = vector.broadcast %4 : vector<8x1xf32> to vector<8x8xf32>
    %7 = vector.broadcast %5 : vector<1x8xf32> to vector<8x8xf32>
    %8 = arith.subf %6, %7 : vector<8x8xf32>
    %9 = arith.mulf %8, %8 : vector<8x8xf32>
    %10 = vector.extract_strided_slice %1 {offsets = [0, 1], sizes = [8, 1], strides = [1, 1]} : vector<8x3xf32> to vector<8x1xf32>
    %11 = vector.extract_strided_slice %3 {offsets = [1, 0], sizes = [1, 8], strides = [1, 1]} : vector<3x8xf32> to vector<1x8xf32>
    %12 = vector.broadcast %10 : vector<8x1xf32> to vector<8x8xf32>
    %13 = vector.broadcast %11 : vector<1x8xf32> to vector<8x8xf32>
    %14 = arith.subf %12, %13 : vector<8x8xf32>
    %15 = arith.mulf %14, %14 : vector<8x8xf32>
    %16 = arith.addf %9, %15 : vector<8x8xf32>
    %17 = vector.extract_strided_slice %1 {offsets = [0, 2], sizes = [8, 1], strides = [1, 1]} : vector<8x3xf32> to vector<8x1xf32>
    %18 = vector.extract_strided_slice %3 {offsets = [2, 0], sizes = [1, 8], strides = [1, 1]} : vector<3x8xf32> to vector<1x8xf32>
    %19 = vector.broadcast %17 : vector<8x1xf32> to vector<8x8xf32>
    %20 = vector.broadcast %18 : vector<1x8xf32> to vector<8x8xf32>
    %21 = arith.subf %19, %20 : vector<8x8xf32>
    %22 = arith.mulf %21, %21 : vector<8x8xf32>
    %23 = arith.addf %16, %22 : vector<8x8xf32>
    %24 = vector.shape_cast %23 : vector<8x8xf32> to vector<8x8x1xf32>
    %c0_5 = arith.constant 0 : index
    %c0_6 = arith.constant 0 : index
    %c0_7 = arith.constant 0 : index
    %25 = vector.load %arg7[%c0_5, %c0_6, %c0_7] : memref<1x1x15xf32, #tpu.memory_space<vmem>>, vector<1x1x15xf32>
    %26 = vector.broadcast %24 : vector<8x8x1xf32> to vector<8x8x15xf32>
    %27 = vector.broadcast %25 : vector<1x1x15xf32> to vector<8x8x15xf32>
    %28 = arith.cmpf ogt, %26, %27 : vector<8x8x15xf32>
    %29 = vector.shape_cast %23 : vector<8x8xf32> to vector<8x8x1xf32>
    %c0_8 = arith.constant 0 : index
    %c0_9 = arith.constant 0 : index
    %c0_10 = arith.constant 0 : index
    %30 = vector.load %arg8[%c0_8, %c0_9, %c0_10] : memref<1x1x15xf32, #tpu.memory_space<vmem>>, vector<1x1x15xf32>
    %31 = vector.broadcast %29 : vector<8x8x1xf32> to vector<8x8x15xf32>
    %32 = vector.broadcast %30 : vector<1x1x15xf32> to vector<8x8x15xf32>
    %33 = arith.cmpf olt, %31, %32 : vector<8x8x15xf32>
    %34 = arith.andi %28, %33 : vector<8x8x15xi1>
    %35 = arith.extui %34 : vector<8x8x15xi1> to vector<8x8x15xi32>
    %36 = arith.sitofp %35 : vector<8x8x15xi32> to vector<8x8x15xf32>
    %37 = vector.shape_cast %36 : vector<8x8x15xf32> to vector<64x15xf32>
    %c0_11 = arith.constant 0 : index
    %c0_12 = arith.constant 0 : index
    %38 = vector.load %arg9[%c0_11, %c0_12] : memref<15x16xf32, #tpu.memory_space<vmem>>, vector<15x16xf32>
    %cst = arith.constant dense<0.000000e+00> : vector<64x16xf32>
    %39 = tpu.matmul %37, %38, %cst {dimension_numbers = #tpu.dot_dimension_numbers<[1], [0], [0], [1], [0, 0, 1, 1], [], []>, precision = #tpu.contract_precision<fp32>} : vector<64x15xf32>, vector<15x16xf32>, vector<64x16xf32> -> vector<64x16xf32>
    %40 = vector.shape_cast %39 : vector<64x16xf32> to vector<8x8x16xf32>
    %c0_13 = arith.constant 0 : index
    %c0_14 = arith.constant 0 : index
    %c0_15 = arith.constant 0 : index
    %c0_16 = arith.constant 0 : index
    %41 = vector.load %arg5[%c0_13, %c0_14, %c0_15, %c0_16] : memref<1x8x8x16xf32, #tpu.memory_space<vmem>>, vector<1x8x8x16xf32>
    %42 = vector.shape_cast %41 : vector<1x8x8x16xf32> to vector<8x8x16xf32>
    %43 = arith.addf %42, %40 : vector<8x8x16xf32>
    %c0_17 = arith.constant 0 : index
    %c0_18 = arith.constant 0 : index
    %c0_19 = arith.constant 0 : index
    %44 = vector.load %arg10[%c0_17, %c0_18, %c0_19] : memref<1x1x16xf32, #tpu.memory_space<vmem>>, vector<1x1x16xf32>
    %45 = vector.broadcast %44 : vector<1x1x16xf32> to vector<8x8x16xf32>
    %46 = arith.addf %43, %45 : vector<8x8x16xf32>
    %c0_20 = arith.constant 0 : index
    %c0_21 = arith.constant 0 : index
    %c0_22 = arith.constant 0 : index
    %c0_23 = arith.constant 0 : index
    %47 = vector.load %arg6[%c0_20, %c0_21, %c0_22, %c0_23] : memref<1x8x8x16xf32, #tpu.memory_space<vmem>>, vector<1x8x8x16xf32>
    %48 = vector.shape_cast %47 : vector<1x8x8x16xf32> to vector<8x8x16xf32>
    %cst_24 = arith.constant dense<0.000000e+00> : vector<8x8xf32>
    %49 = vector.multi_reduction <add>, %48, %cst_24 [2] : vector<8x8x16xf32> to vector<8x8xf32>
    %50 = vector.shape_cast %49 : vector<8x8xf32> to vector<8x8x1xf32>
    %cst_25 = arith.constant 1.600000e+01 : f32
    %51 = vector.broadcast %cst_25 : f32 to vector<8x8x1xf32>
    %52 = arith.divf %50, %51 : vector<8x8x1xf32>
    %53 = vector.broadcast %52 : vector<8x8x1xf32> to vector<8x8x16xf32>
    %54 = arith.subf %48, %53 : vector<8x8x16xf32>
    %55 = arith.mulf %54, %54 : vector<8x8x16xf32>
    %cst_26 = arith.constant dense<0.000000e+00> : vector<8x8xf32>
    %56 = vector.multi_reduction <add>, %55, %cst_26 [2] : vector<8x8x16xf32> to vector<8x8xf32>
    %57 = vector.shape_cast %56 : vector<8x8xf32> to vector<8x8x1xf32>
    %cst_27 = arith.constant 1.600000e+01 : f32
    %58 = vector.broadcast %cst_27 : f32 to vector<8x8x1xf32>
    %59 = arith.divf %57, %58 : vector<8x8x1xf32>
    %cst_28 = arith.constant 9.99999974E-6 : f32
    %60 = vector.broadcast %cst_28 : f32 to vector<8x8x1xf32>
    %61 = arith.addf %59, %60 : vector<8x8x1xf32>
    %62 = math.rsqrt %61 : vector<8x8x1xf32>
    %63 = vector.broadcast %62 : vector<8x8x1xf32> to vector<8x8x16xf32>
    %64 = arith.mulf %54, %63 : vector<8x8x16xf32>
    %c0_29 = arith.constant 0 : index
    %c0_30 = arith.constant 0 : index
    %c0_31 = arith.constant 0 : index
    %65 = vector.load %arg11[%c0_29, %c0_30, %c0_31] : memref<1x1x16xf32, #tpu.memory_space<vmem>>, vector<1x1x16xf32>
    %66 = vector.broadcast %65 : vector<1x1x16xf32> to vector<8x8x16xf32>
    %67 = arith.mulf %64, %66 : vector<8x8x16xf32>
    %68 = arith.addf %46, %67 : vector<8x8x16xf32>
    %c0_32 = arith.constant 0 : index
    %c0_33 = arith.constant 0 : index
    %c0_34 = arith.constant 0 : index
    %69 = vector.load %arg12[%c0_32, %c0_33, %c0_34] : memref<1x1x16xf32, #tpu.memory_space<vmem>>, vector<1x1x16xf32>
    %70 = vector.broadcast %69 : vector<1x1x16xf32> to vector<8x8x16xf32>
    %71 = arith.addf %68, %70 : vector<8x8x16xf32>
    %c0_35 = arith.constant 0 : index
    %c0_36 = arith.constant 0 : index
    %c0_37 = arith.constant 0 : index
    %c0_38 = arith.constant 0 : index
    %72 = vector.load %arg13[%c0_35, %c0_36, %c0_37, %c0_38] : memref<1x8x8x16xf32, #tpu.memory_space<vmem>>, vector<1x8x8x16xf32>
    %73 = vector.shape_cast %72 : vector<1x8x8x16xf32> to vector<8x8x16xf32>
    %74 = vector.shape_cast %71 : vector<8x8x16xf32> to vector<1x8x8x16xf32>
    tpu.vector_store %arg13[%c0_35, %c0_36, %c0_37, %c0_38], %74 {strides = array<i32>} : memref<1x8x8x16xf32, #tpu.memory_space<vmem>>, vector<1x8x8x16xf32>,
    return
  }
  func.func @transform_0(%arg0: i32, %arg1: i32, %arg2: i32) -> (i32, i32, i32) {
    %c0_i32 = arith.constant 0 : i32
    %c0_i32_0 = arith.constant 0 : i32
    return %arg0, %arg1, %c0_i32 : i32, i32, i32
  }
  func.func @transform_1(%arg0: i32, %arg1: i32, %arg2: i32) -> (i32, i32, i32) {
    %c0_i32 = arith.constant 0 : i32
    %c0_i32_0 = arith.constant 0 : i32
    return %arg0, %c0_i32, %arg2 : i32, i32, i32
  }
  func.func @transform_2(%arg0: i32, %arg1: i32, %arg2: i32) -> (i32, i32, i32, i32) {
    %c0_i32 = arith.constant 0 : i32
    %c0_i32_0 = arith.constant 0 : i32
    return %arg0, %arg1, %arg2, %c0_i32 : i32, i32, i32, i32
  }
  func.func @transform_3(%arg0: i32, %arg1: i32, %arg2: i32) -> (i32, i32, i32, i32) {
    %c0_i32 = arith.constant 0 : i32
    %c0_i32_0 = arith.constant 0 : i32
    return %arg0, %arg1, %arg2, %c0_i32 : i32, i32, i32, i32
  }
  func.func @transform_4(%arg0: i32, %arg1: i32, %arg2: i32) -> (i32, i32, i32) {
    %c0_i32 = arith.constant 0 : i32
    %c0_i32_0 = arith.constant 0 : i32
    %c0_i32_1 = arith.constant 0 : i32
    %c0_i32_2 = arith.constant 0 : i32
    return %c0_i32, %c0_i32_0, %c0_i32_1 : i32, i32, i32
  }
  func.func @transform_5(%arg0: i32, %arg1: i32, %arg2: i32) -> (i32, i32, i32) {
    %c0_i32 = arith.constant 0 : i32
    %c0_i32_0 = arith.constant 0 : i32
    %c0_i32_1 = arith.constant 0 : i32
    %c0_i32_2 = arith.constant 0 : i32
    return %c0_i32, %c0_i32_0, %c0_i32_1 : i32, i32, i32
  }
  func.func @transform_6(%arg0: i32, %arg1: i32, %arg2: i32) -> (i32, i32) {
    %c0_i32 = arith.constant 0 : i32
    %c0_i32_0 = arith.constant 0 : i32
    %c0_i32_1 = arith.constant 0 : i32
    return %c0_i32, %c0_i32_0 : i32, i32
  }
  func.func @transform_7(%arg0: i32, %arg1: i32, %arg2: i32) -> (i32, i32, i32) {
    %c0_i32 = arith.constant 0 : i32
    %c0_i32_0 = arith.constant 0 : i32
    %c0_i32_1 = arith.constant 0 : i32
    %c0_i32_2 = arith.constant 0 : i32
    return %c0_i32, %c0_i32_0, %c0_i32_1 : i32, i32, i32
  }
  func.func @transform_8(%arg0: i32, %arg1: i32, %arg2: i32) -> (i32, i32, i32) {
    %c0_i32 = arith.constant 0 : i32
    %c0_i32_0 = arith.constant 0 : i32
    %c0_i32_1 = arith.constant 0 : i32
    %c0_i32_2 = arith.constant 0 : i32
    return %c0_i32, %c0_i32_0, %c0_i32_1 : i32, i32, i32
  }
  func.func @transform_9(%arg0: i32, %arg1: i32, %arg2: i32) -> (i32, i32, i32) {
    %c0_i32 = arith.constant 0 : i32
    %c0_i32_0 = arith.constant 0 : i32
    %c0_i32_1 = arith.constant 0 : i32
    %c0_i32_2 = arith.constant 0 : i32
    return %c0_i32, %c0_i32_0, %c0_i32_1 : i32, i32, i32
  }
  func.func @transform_10(%arg0: i32, %arg1: i32, %arg2: i32) -> (i32, i32, i32, i32) {
    %c0_i32 = arith.constant 0 : i32
    %c0_i32_0 = arith.constant 0 : i32
    return %arg0, %arg1, %arg2, %c0_i32 : i32, i32, i32, i32
  }
}

</mosaic_0001>

<llo_original>
// kernel: recycling_embedder_forward.3
$region0: #{recycling_embedder_forward.3}
  #allocation0 [shape = 'u32[]', space=smem, size = 0x4, offset = 0x4, fixed_abs, tag = 'smem constant byte address 0x4 - core index']
  #allocation1 [shape = 'u32[144,128]{1,0:T(1,128)}', space=vmem, size = 0x12000, scoped, tag = 'internal scratch']
  %s0 = inlined_call_operand.hbm [shape: f32[2,4,8,32], index: 0, kind: input, shape index: {}, may-alias: {0,4}]
  %s1 = inlined_call_operand.vmem [shape: f32[2,8,32], index: 1, kind: input, shape index: {}]
  %s2 = inlined_call_operand.vmem [shape: f32[1,32], index: 2, kind: input, shape index: {}]
  %s3 = inlined_call_operand.vmem [shape: f32[1,32], index: 3, kind: input, shape index: {}]
  %s4 = inlined_call_operand.hbm [shape: f32[2,4,8,32], index: 4, kind: output, shape index: {}, may-alias: {0,4}]
  %s5 = sld [smem:[#allocation0]]
  $region53: #{recycling_embedder_forward.3} parent=0
    _
  %s7 = ssub.s32 1, %s5
  %s8 = scalar_select 0, %s7, %s5
  $region1: #{recycling_embedder_forward.3} parent=0
    #allocation2 [shape = 'u8[8192]{0}', space=vmem, size = 0x2000, scoped, tag = 'input window, operand 0']
    #allocation3 [shape = 's32[2]{0}', space=sflag, size = 0x8, scoped, tag = 'scoped memory for recycling_embedder_forward.3']
    #allocation4 [shape = 's32[2]{0}', space=sflag, size = 0x8, scoped, tag = 'scoped memory for recycling_embedder_forward.3']
    #allocation5 [shape = 'u8[8192]{0}', space=vmem, size = 0x2000, scoped, tag = 'output window, operand 0']
    %9 = vsyncpa [#allocation3], 0
    %s10 = scalar_lea.sflag [#allocation3], 1
    %11 = vsyncpa %s10, 0
    %12 = vsyncpa [#allocation4], 0
    %s13 = scalar_lea.sflag [#allocation4], 1
    %14 = vsyncpa %s13, 0
    loop: start=0, step=1, limit=4
    $region2: #{recycling_embedder_forward.3} parent=1 // loop_pre_header
      _
    $region3: #{recycling_embedder_forward.3} parent=1 // loop_header
      %s16 = sphi 0, %s20
      %p17 = scmp.ge.s32.totalorder %s16, 4
      %s26 = sphi 0, %s28
      %s29 = sphi 0, %s26
      %s30 = sphi 0, %s29
      %s46 = sphi 0, %s30
      %s52 = sphi 0, %s54
      %s55 = sphi 0, %s52
      %s56 = sphi 0, %s55
      %s72 = sphi 0, %s56
      %s76 = sphi 0, %s76
      %s78 = sphi 0, %s76
      %s79 = sphi 0, %s78
      %s93 = sphi 0, %s79
      %s97 = sphi 0, %s97
      %s99 = sphi 0, %s97
      %s100 = sphi 0, %s99
      %s114 = sphi 0, %s100
      %s120 = sphi 0, %s122
      %s123 = sphi 0, %s120
      %s124 = sphi 0, %s123
      %s140 = sphi 0, %s124
    $region4: #{recycling_embedder_forward.3} parent=1 // loop_header_branch
      %19 = sbr.rel (%p17) target = $region8
    $region5: #{recycling_embedder_forward.3} parent=1 // loop_body
      %s21 = ssub.s32 %s16, 1
      %s22 = ssub.s32 %s16, 2
      %s23 = sadd.s32 %s16, 1
      %s24 = ssub.s32 %s16, %s23
      %p25 = scmp.eq.s32.totalorder %s24, 0
      %s27 = sadd.s32 %s26, 1
      %s28 = scalar_select %p25, %s26, %s27
      %p31 = pneg %p25
      %p32 = scmp.eq.s32.totalorder %s16, 1
      %p33 = por %p31, %p32
      %p34 = scmp.ne.s32.totalorder %s26, %s29
      %p35 = scmp.eq.s32.totalorder %s16, 0
      %p36 = por %p34, %p35
      %p37 = scmp.ne.s32.totalorder %s26, %s29
      %p38 = scmp.eq.s32.totalorder %s21, 1
      %p39 = por %p37, %p38
      %p40 = scmp.ne.s32.totalorder %s29, %s30
      %p41 = scmp.eq.s32.totalorder %s21, 0
      %p42 = por %p40, %p41
      %p43 = scmp.ne.s32.totalorder %s29, %s30
      %p44 = scmp.eq.s32.totalorder %s22, 1
      %p45 = por %p43, %p44
      %p47 = scmp.ne.s32.totalorder %s30, %s46
      %p48 = scmp.eq.s32.totalorder %s22, 0
      %p49 = por %p47, %p48
      %s50 = ssub.s32 %s16, %s23
      %p51 = scmp.eq.s32.totalorder %s50, 0
      %s53 = sadd.s32 %s52, 1
      %s54 = scalar_select %p51, %s52, %s53
      %p57 = pneg %p51
      %p58 = scmp.eq.s32.totalorder %s16, 1
      %p59 = por %p57, %p58
      %p60 = scmp.ne.s32.totalorder %s52, %s55
      %p61 = scmp.eq.s32.totalorder %s16, 0
      %p62 = por %p60, %p61
      %p63 = scmp.ne.s32.totalorder %s52, %s55
      %p64 = scmp.eq.s32.totalorder %s21, 1
      %p65 = por %p63, %p64
      %p66 = scmp.ne.s32.totalorder %s55, %s56
      %p67 = scmp.eq.s32.totalorder %s21, 0
      %p68 = por %p66, %p67
      %p69 = scmp.ne.s32.totalorder %s55, %s56
      %p70 = scmp.eq.s32.totalorder %s22, 1
      %p71 = por %p69, %p70
      %p73 = scmp.ne.s32.totalorder %s56, %s72
      %p74 = scmp.eq.s32.totalorder %s22, 0
      %p75 = por %p73, %p74
      %s77 = sadd.s32 %s76, 1
      %p80 = scmp.eq.s32.totalorder %s16, 1
      %p81 = scmp.ne.s32.totalorder %s76, %s78
      %p82 = scmp.eq.s32.totalorder %s16, 0
      %p83 = por %p81, %p82
      %p84 = scmp.ne.s32.totalorder %s76, %s78
      %p85 = scmp.eq.s32.totalorder %s21, 1
      %p86 = por %p84, %p85
      %p87 = scmp.ne.s32.totalorder %s78, %s79
      %p88 = scmp.eq.s32.totalorder %s21, 0
      %p89 = por %p87, %p88
      %p90 = scmp.ne.s32.totalorder %s78, %s79
      %p91 = scmp.eq.s32.totalorder %s22, 1
      %p92 = por %p90, %p91
      %p94 = scmp.ne.s32.totalorder %s79, %s93
      %p95 = scmp.eq.s32.totalorder %s22, 0
      %p96 = por %p94, %p95
      %s98 = sadd.s32 %s97, 1
      %p101 = scmp.eq.s32.totalorder %s16, 1
      %p102 = scmp.ne.s32.totalorder %s97, %s99
      %p103 = scmp.eq.s32.totalorder %s16, 0
      %p104 = por %p102, %p103
      %p105 = scmp.ne.s32.totalorder %s97, %s99
      %p106 = scmp.eq.s32.totalorder %s21, 1
      %p107 = por %p105, %p106
      %p108 = scmp.ne.s32.totalorder %s99, %s100
      %p109 = scmp.eq.s32.totalorder %s21, 0
      %p110 = por %p108, %p109
      %p111 = scmp.ne.s32.totalorder %s99, %s100
      %p112 = scmp.eq.s32.totalorder %s22, 1
      %p113 = por %p111, %p112
      %p115 = scmp.ne.s32.totalorder %s100, %s114
      %p116 = scmp.eq.s32.totalorder %s22, 0
      %p117 = por %p115, %p116
      %s118 = ssub.s32 %s16, %s23
      %p119 = scmp.eq.s32.totalorder %s118, 0
      %s121 = sadd.s32 %s120, 1
      %s122 = scalar_select %p119, %s120, %s121
      %p125 = pneg %p119
      %p126 = scmp.eq.s32.totalorder %s16, 1
      %p127 = por %p125, %p126
      %p128 = scmp.ne.s32.totalorder %s120, %s123
      %p129 = scmp.eq.s32.totalorder %s16, 0
      %p130 = por %p128, %p129
      %p131 = scmp.ne.s32.totalorder %s120, %s123
      %p132 = scmp.eq.s32.totalorder %s21, 1
      %p133 = por %p131, %p132
      %p134 = scmp.ne.s32.totalorder %s123, %s124
      %p135 = scmp.eq.s32.totalorder %s21, 0
      %p136 = por %p134, %p135
      %p137 = scmp.ne.s32.totalorder %s123, %s124
      %p138 = scmp.eq.s32.totalorder %s22, 1
      %p139 = por %p137, %p138
      %p141 = scmp.ne.s32.totalorder %s124, %s140
      %p142 = scmp.eq.s32.totalorder %s22, 0
      %p143 = por %p141, %p142
      %p144 = scmp.le.s32.totalorder 1, %s16
      %p145 = scmp.lt.s32.totalorder %s16, 3
      %p146 = pnand %p144, %p145
      %p147 = pneg %p146
      // Predicated region
      $region9: #{recycling_embedder_forward.3} parent=5 // pred_check
        _
      $region10: #{recycling_embedder_forward.3} parent=5 // pred_check_branch
        %149 = sbr.rel (%p146) target = $region12
      $region11: #{recycling_embedder_forward.3} parent=5 // pred_region
        %s150 = ssub.s32 %s16, 1
        // Predicated region
        $region13: #{recycling_embedder_forward.3} parent=11 // pred_check
          %p151 = pneg %p89
        $region14: #{recycling_embedder_forward.3} parent=11 // pred_check_branch
          %153 = sbr.rel (%p151) target = $region16
        $region15: #{recycling_embedder_forward.3} parent=11 // pred_region
          _
        $region16: #{recycling_embedder_forward.3} parent=11 // pred_fallthru
          _
        // Predicated region
        $region17: #{recycling_embedder_forward.3} parent=11 // pred_check
          %p154 = pneg %p110
        $region18: #{recycling_embedder_forward.3} parent=11 // pred_check_branch
          %156 = sbr.rel (%p154) target = $region20
        $region19: #{recycling_embedder_forward.3} parent=11 // pred_region
          _
        $region20: #{recycling_embedder_forward.3} parent=11 // pred_fallthru
          _
      $region12: #{recycling_embedder_forward.3} parent=5 // pred_fallthru
        _
      %p157 = scmp.lt.s32.totalorder %s16, 2
      // Predicated region
      $region21: #{recycling_embedder_forward.3} parent=5 // pred_check
        %p158 = pneg %p157
      $region22: #{recycling_embedder_forward.3} parent=5 // pred_check_branch
        %160 = sbr.rel (%p158) target = $region24
      $region23: #{recycling_embedder_forward.3} parent=5 // pred_region
        // Predicated region
        $region25: #{recycling_embedder_forward.3} parent=23 // pred_check
          %p161 = pneg %p36
        $region26: #{recycling_embedder_forward.3} parent=23 // pred_check_branch
          %163 = sbr.rel (%p161) target = $region28
        $region27: #{recycling_embedder_forward.3} parent=23 // pred_region
          %s164 = sand.u32 %s26, 1
          %s165 = scalar_lea.sflag [#allocation3], %s164
          %s166 = sand.u32 %s26, 1
          %s167 = smul.addr %s166, 8
          %s168 = scalar_lea.vmem [#allocation2], %s167
          %s170 = ssub.s32 128, 128
          %171 = vsyncadd %s165, %s170
          %s172 = smul.addr %s16, 4
          %s173 = smul.addr %s172, 128
          %s174 = scalar_lea.hbm %s0, %s173
          %s176 = sshll.u32 %s168, 4
          %s177 = int_to_ptr.vmem [resolvable:$true] %s176
          %179 = dma.hbm_to_vmem [thread:$0]  %s174, 128, %s177, %s165
        $region28: #{recycling_embedder_forward.3} parent=23 // pred_fallthru
          _
        // Predicated region
        $region29: #{recycling_embedder_forward.3} parent=23 // pred_check
          %p180 = pneg %p62
        $region30: #{recycling_embedder_forward.3} parent=23 // pred_check_branch
          %182 = sbr.rel (%p180) target = $region32
        $region31: #{recycling_embedder_forward.3} parent=23 // pred_region
          %p183 = scmp.lt.s32.totalorder %s16, 1
          %s184 = scalar_select %p183, %s16, 1
          %s185 = smul.addr %s184, 8
          %s186 = scalar_lea.vmem %s1, %s185
        $region32: #{recycling_embedder_forward.3} parent=23 // pred_fallthru
          _
      $region24: #{recycling_embedder_forward.3} parent=5 // pred_fallthru
        _
      %p187 = scmp.le.s32.totalorder 1, %s16
      %p188 = scmp.lt.s32.totalorder %s16, 3
      %p189 = pnand %p187, %p188
      %p190 = pneg %p189
      // Predicated region
      $region33: #{recycling_embedder_forward.3} parent=5 // pred_check
        _
      $region34: #{recycling_embedder_forward.3} parent=5 // pred_check_branch
        %192 = sbr.rel (%p189) target = $region36
      $region35: #{recycling_embedder_forward.3} parent=5 // pred_region
        %s193 = ssub.s32 %s16, 1
        %s194 = sand.u32 %s29, 1
        %s195 = scalar_lea.sflag [#allocation3], %s194
        %s196 = sand.u32 %s29, 1
        %s197 = smul.addr %s196, 8
        %s198 = scalar_lea.vmem [#allocation2], %s197
        // Predicated region
        $region37: #{recycling_embedder_forward.3} parent=35 // pred_check
          %p199 = pneg %p42
        $region38: #{recycling_embedder_forward.3} parent=35 // pred_check_branch
          %201 = sbr.rel (%p199) target = $region40
        $region39: #{recycling_embedder_forward.3} parent=35 // pred_region
          %202 = dma.done %s195, 128
        $region40: #{recycling_embedder_forward.3} parent=35 // pred_fallthru
          _
        %s203 = sand.u32 %s29, 1
        %s204 = scalar_lea.sflag [#allocation3], %s203
        %s205 = sand.u32 %s29, 1
        %s206 = smul.addr %s205, 8
        %s207 = scalar_lea.vmem [#allocation2], %s206
        %p208 = pneg %p42
        %p209 = pneg %p39
        %p210 = scmp.lt.s32.totalorder %s21, 1
        %s211 = scalar_select %p210, %s21, 1
        %s212 = smul.addr %s211, 8
        %s213 = scalar_lea.vmem %s1, %s212
        %p214 = pneg %p68
        %p215 = pneg %p65
        %p216 = pneg %p89
        %p217 = pneg %p86
        %p218 = pneg %p110
        %p219 = pneg %p107
        %p220 = pneg %p136
        %p221 = pneg %p133
        %s222 = sand.u32 %s123, 1
        %s223 = scalar_lea.sflag [#allocation4], %s222
        %s224 = sand.u32 %s123, 1
        %s225 = smul.addr %s224, 8
        %s226 = scalar_lea.vmem [#allocation5], %s225
        %p227 = scmp.lt.s32.totalorder %s21, 1
        %s228 = scalar_select %p227, %s21, 1
        %s229 = smul.addr %s228, 8
        %s230 = scalar_lea.vmem %s1, %s229
        %v231 = vld [vmem:[%s230] sm:$0xff]
        %vm232 = vcmask 261120
        %v233 = vsel %vm232, %v231, 0.0
        %234 = vadd.xlane.f32.xlu0 %v233
        %v235 = vpop.xlane.xlu0 %234
        %v236 = vrcp.pop 32.0
        %v237 = vmul.f32 %v235, %v236
        %v238 = vsub.f32 %v231, %v237
        %v239 = vmul.f32 %v238, %v238
        %v240 = vsel %vm232, %v239, 0.0
        %241 = vadd.xlane.f32.xlu0 %v240
        %v242 = vpop.xlane.xlu0 %241
        %v243 = vmul.f32 %v242, %v236
        %v244 = vadd.f32 %v243, 1e-05
        %v245 = vrsqrt.pop %v244
        %v246 = vmul.f32 %v238, %v245
        %v247 = vld [vmem:[%s2] sm:$0x1]
        %v249 = vlaneseq
        %v250 = vshrl.u32 %v249, 7
        %v251 = vsub.s32 0, %v250
        %v252 = vrot.slane %v247, %v251
        %v254 = vmul.f32 %v246, %v252
        %v255 = vld [vmem:[%s3] sm:$0x1]
        %v257 = vlaneseq
        %v258 = vshrl.u32 %v257, 7
        %v259 = vsub.s32 0, %v258
        %v260 = vrot.slane %v255, %v259
        %v262 = vadd.f32 %v254, %v260
        %v263 = vld [vmem:[%s198] sm:$0xff]
        %v264 = vadd.f32 %v263, %v262
        %265 = vst.msk [vmem:[%s226] sm:$0xff] %vm232, %v264
        %s266 = sand.u32 %s123, 1
        %s267 = scalar_lea.sflag [#allocation4], %s266
        %s268 = sand.u32 %s123, 1
        %s269 = smul.addr %s268, 8
        %s270 = scalar_lea.vmem [#allocation5], %s269
        // Predicated region
        $region41: #{recycling_embedder_forward.3} parent=35 // pred_check
          %p271 = pneg %p133
        $region42: #{recycling_embedder_forward.3} parent=35 // pred_check_branch
          %273 = sbr.rel (%p271) target = $region44
        $region43: #{recycling_embedder_forward.3} parent=35 // pred_region
          %s275 = ssub.s32 128, 128
          %276 = vsyncadd %s267, %s275
          %s277 = smul.addr %s21, 4
          %s278 = smul.addr %s277, 128
          %s279 = scalar_lea.hbm %s4, %s278
          %s281 = sshll.u32 %s270, 4
          %s282 = int_to_ptr.vmem [resolvable:$true] %s281
          %284 = dma.vmem_to_hbm [thread:$0]  %s282, 128, %s279, %s267
        $region44: #{recycling_embedder_forward.3} parent=35 // pred_fallthru
          _
      $region36: #{recycling_embedder_forward.3} parent=5 // pred_fallthru
        _
      %p285 = scmp.le.s32.totalorder 2, %s16
      // Predicated region
      $region45: #{recycling_embedder_forward.3} parent=5 // pred_check
        %p286 = pneg %p285
      $region46: #{recycling_embedder_forward.3} parent=5 // pred_check_branch
        %288 = sbr.rel (%p286) target = $region48
      $region47: #{recycling_embedder_forward.3} parent=5 // pred_region
        %s289 = ssub.s32 %s16, 2
        // Predicated region
        $region49: #{recycling_embedder_forward.3} parent=47 // pred_check
          %p290 = pneg %p139
        $region50: #{recycling_embedder_forward.3} parent=47 // pred_check_branch
          %292 = sbr.rel (%p290) target = $region52
        $region51: #{recycling_embedder_forward.3} parent=47 // pred_region
          %s293 = sand.u32 %s124, 1
          %s294 = scalar_lea.sflag [#allocation4], %s293
          %s295 = sand.u32 %s124, 1
          %s296 = smul.addr %s295, 8
          %s297 = scalar_lea.vmem [#allocation5], %s296
          %298 = dma.done %s294, 128
        $region52: #{recycling_embedder_forward.3} parent=47 // pred_fallthru
          _
      $region48: #{recycling_embedder_forward.3} parent=5 // pred_fallthru
        _
    $region6: #{recycling_embedder_forward.3} parent=1 // loop_footer
      %s20 = sadd.s32 1, %s16
    $region7: #{recycling_embedder_forward.3} parent=1 // loop_footer_branch
      %15 = sbr.rel target = $region3
    $region8: #{recycling_embedder_forward.3} parent=1 // loop_exit
      _
    %299 = vsyncpa [#allocation3], 1
    %s300 = scalar_lea.sflag [#allocation3], 1
    %301 = vsyncpa %s300, 1
    %302 = vsyncpa [#allocation4], 1
    %s303 = scalar_lea.sflag [#allocation4], 1
    %304 = vsyncpa %s303, 1

// kernel: recycling_embedder_forward.2
$region0: #{recycling_embedder_forward.2}
  #allocation0 [shape = 'u32[]', space=smem, size = 0x4, offset = 0x4, fixed_abs, tag = 'smem constant byte address 0x4 - core index']
  #allocation1 [shape = 'u32[144,128]{1,0:T(1,128)}', space=vmem, size = 0x12000, scoped, tag = 'internal scratch']
  %s0 = inlined_call_operand.vmem [shape: f32[2,8,3], index: 0, kind: input, shape index: {}]
  %s1 = inlined_call_operand.vmem [shape: f32[2,3,8], index: 1, kind: input, shape index: {}]
  %s2 = inlined_call_operand.vmem [shape: f32[2,8,8,16], index: 2, kind: input, shape index: {}]
  %s3 = inlined_call_operand.hbm [shape: f32[2,8,8,16], index: 3, kind: input, shape index: {}]
  %s4 = inlined_call_operand.vmem [shape: f32[1,1,15], index: 4, kind: input, shape index: {}]
  %s5 = inlined_call_operand.vmem [shape: f32[1,1,15], index: 5, kind: input, shape index: {}]
  %s6 = inlined_call_operand.vmem [shape: f32[15,16], index: 6, kind: input, shape index: {}]
  %s7 = inlined_call_operand.vmem [shape: f32[1,1,16], index: 7, kind: input, shape index: {}]
  %s8 = inlined_call_operand.vmem [shape: f32[1,1,16], index: 8, kind: input, shape index: {}]
  %s9 = inlined_call_operand.vmem [shape: f32[1,1,16], index: 9, kind: input, shape index: {}]
  %s10 = inlined_call_operand.hbm [shape: f32[2,8,8,16], index: 10, kind: output, shape index: {}]
  %s11 = sld [smem:[#allocation0]]
  $region77: #{recycling_embedder_forward.2} parent=0
    _
  %s13 = ssub.s32 1, %s11
  %s14 = scalar_select 0, %s13, %s11
  $region1: #{recycling_embedder_forward.2} parent=0
    #allocation2 [shape = 'u8[65536]{0}', space=vmem, size = 0x10000, scoped, tag = 'input window, operand 3']
    #allocation3 [shape = 's32[2]{0}', space=sflag, size = 0x8, scoped, tag = 'scoped memory for recycling_embedder_forward.2']
    #allocation4 [shape = 's32[2]{0}', space=sflag, size = 0x8, scoped, tag = 'scoped memory for recycling_embedder_forward.2']
    #allocation5 [shape = 'u8[65536]{0}', space=vmem, size = 0x10000, scoped, tag = 'output window, operand 0']
    %15 = vsyncpa [#allocation3], 0
    %s16 = scalar_lea.sflag [#allocation3], 1
    %17 = vsyncpa %s16, 0
    %18 = vsyncpa [#allocation4], 0
    %s19 = scalar_lea.sflag [#allocation4], 1
    %20 = vsyncpa %s19, 0
    loop: start=0, step=1, limit=4
    $region2: #{recycling_embedder_forward.2} parent=1 // loop_pre_header
      _
    $region3: #{recycling_embedder_forward.2} parent=1 // loop_header
      %s22 = sphi 0, %s26
      %p23 = scmp.ge.s32.totalorder %s22, 4
      %s29 = sphi 0, %s48
      %s30 = sphi 0, %s44
      %s31 = sphi 0, %s40
      %s32 = sphi 0, %s29
      %s33 = sphi 0, %s30
      %s34 = sphi 0, %s31
      %s35 = sphi 0, %s32
      %s36 = sphi 0, %s33
      %s37 = sphi 0, %s34
      %s53 = sphi 0, %s55
      %s56 = sphi 0, %s53
      %s57 = sphi 0, %s56
      %s73 = sphi 0, %s57
      %s81 = sphi 0, %s83
      %s84 = sphi 0, %s81
      %s85 = sphi 0, %s84
      %s101 = sphi 0, %s85
      %s111 = sphi 0, %s113
      %s114 = sphi 0, %s111
      %s115 = sphi 0, %s114
      %s131 = sphi 0, %s115
      %s141 = sphi 0, %s143
      %s144 = sphi 0, %s141
      %s145 = sphi 0, %s144
      %s161 = sphi 0, %s145
      %s165 = sphi 0, %s165
      %s167 = sphi 0, %s165
      %s168 = sphi 0, %s167
      %s182 = sphi 0, %s168
      %s186 = sphi 0, %s186
      %s188 = sphi 0, %s186
      %s189 = sphi 0, %s188
      %s203 = sphi 0, %s189
      %s207 = sphi 0, %s207
      %s209 = sphi 0, %s207
      %s210 = sphi 0, %s209
      %s224 = sphi 0, %s210
      %s228 = sphi 0, %s228
      %s230 = sphi 0, %s228
      %s231 = sphi 0, %s230
      %s245 = sphi 0, %s231
      %s249 = sphi 0, %s249
      %s251 = sphi 0, %s249
      %s252 = sphi 0, %s251
      %s266 = sphi 0, %s252
      %s270 = sphi 0, %s270
      %s272 = sphi 0, %s270
      %s273 = sphi 0, %s272
      %s287 = sphi 0, %s273
      %s297 = sphi 0, %s299
      %s300 = sphi 0, %s297
      %s301 = sphi 0, %s300
      %s317 = sphi 0, %s301
    $region4: #{recycling_embedder_forward.2} parent=1 // loop_header_branch
      %25 = sbr.rel (%p23) target = $region8
    $region5: #{recycling_embedder_forward.2} parent=1 // loop_body
      %s27 = ssub.s32 %s22, 1
      %s28 = ssub.s32 %s22, 2
      %s38 = sadd.s32 1, %s31
      %p39 = scmp.ge.s32.totalorder %s38, 1
      %s40 = scalar_select %p39, 0, %s38
      %s41 = sadd.s32 1, %s30
      %s42 = scalar_select %p39, %s41, %s30
      %p43 = scmp.ge.s32.totalorder %s42, 1
      %s44 = scalar_select %p43, 0, %s42
      %s45 = sadd.s32 1, %s29
      %s46 = scalar_select %p43, %s45, %s29
      %p47 = scmp.ge.s32.totalorder %s46, 2
      %s48 = scalar_select %p47, 0, %s46
      %s49 = ssub.s32 %s29, %s48
      %s50 = ssub.s32 %s30, %s44
      %s51 = sor.u32 %s49, %s50
      %p52 = scmp.eq.s32.totalorder %s51, 0
      %s54 = sadd.s32 %s53, 1
      %s55 = scalar_select %p52, %s53, %s54
      %p58 = pneg %p52
      %p59 = scmp.eq.s32.totalorder %s22, 1
      %p60 = por %p58, %p59
      %p61 = scmp.ne.s32.totalorder %s53, %s56
      %p62 = scmp.eq.s32.totalorder %s22, 0
      %p63 = por %p61, %p62
      %p64 = scmp.ne.s32.totalorder %s53, %s56
      %p65 = scmp.eq.s32.totalorder %s27, 1
      %p66 = por %p64, %p65
      %p67 = scmp.ne.s32.totalorder %s56, %s57
      %p68 = scmp.eq.s32.totalorder %s27, 0
      %p69 = por %p67, %p68
      %p70 = scmp.ne.s32.totalorder %s56, %s57
      %p71 = scmp.eq.s32.totalorder %s28, 1
      %p72 = por %p70, %p71
      %p74 = scmp.ne.s32.totalorder %s57, %s73
      %p75 = scmp.eq.s32.totalorder %s28, 0
      %p76 = por %p74, %p75
      %s77 = ssub.s32 %s29, %s48
      %s78 = ssub.s32 %s31, %s40
      %s79 = sor.u32 %s77, %s78
      %p80 = scmp.eq.s32.totalorder %s79, 0
      %s82 = sadd.s32 %s81, 1
      %s83 = scalar_select %p80, %s81, %s82
      %p86 = pneg %p80
      %p87 = scmp.eq.s32.totalorder %s22, 1
      %p88 = por %p86, %p87
      %p89 = scmp.ne.s32.totalorder %s81, %s84
      %p90 = scmp.eq.s32.totalorder %s22, 0
      %p91 = por %p89, %p90
      %p92 = scmp.ne.s32.totalorder %s81, %s84
      %p93 = scmp.eq.s32.totalorder %s27, 1
      %p94 = por %p92, %p93
      %p95 = scmp.ne.s32.totalorder %s84, %s85
      %p96 = scmp.eq.s32.totalorder %s27, 0
      %p97 = por %p95, %p96
      %p98 = scmp.ne.s32.totalorder %s84, %s85
      %p99 = scmp.eq.s32.totalorder %s28, 1
      %p100 = por %p98, %p99
      %p102 = scmp.ne.s32.totalorder %s85, %s101
      %p103 = scmp.eq.s32.totalorder %s28, 0
      %p104 = por %p102, %p103
      %s105 = ssub.s32 %s29, %s48
      %s106 = ssub.s32 %s30, %s44
      %s107 = sor.u32 %s105, %s106
      %s108 = ssub.s32 %s31, %s40
      %s109 = sor.u32 %s107, %s108
      %p110 = scmp.eq.s32.totalorder %s109, 0
      %s112 = sadd.s32 %s111, 1
      %s113 = scalar_select %p110, %s111, %s112
      %p116 = pneg %p110
      %p117 = scmp.eq.s32.totalorder %s22, 1
      %p118 = por %p116, %p117
      %p119 = scmp.ne.s32.totalorder %s111, %s114
      %p120 = scmp.eq.s32.totalorder %s22, 0
      %p121 = por %p119, %p120
      %p122 = scmp.ne.s32.totalorder %s111, %s114
      %p123 = scmp.eq.s32.totalorder %s27, 1
      %p124 = por %p122, %p123
      %p125 = scmp.ne.s32.totalorder %s114, %s115
      %p126 = scmp.eq.s32.totalorder %s27, 0
      %p127 = por %p125, %p126
      %p128 = scmp.ne.s32.totalorder %s114, %s115
      %p129 = scmp.eq.s32.totalorder %s28, 1
      %p130 = por %p128, %p129
      %p132 = scmp.ne.s32.totalorder %s115, %s131
      %p133 = scmp.eq.s32.totalorder %s28, 0
      %p134 = por %p132, %p133
      %s135 = ssub.s32 %s29, %s48
      %s136 = ssub.s32 %s30, %s44
      %s137 = sor.u32 %s135, %s136
      %s138 = ssub.s32 %s31, %s40
      %s139 = sor.u32 %s137, %s138
      %p140 = scmp.eq.s32.totalorder %s139, 0
      %s142 = sadd.s32 %s141, 1
      %s143 = scalar_select %p140, %s141, %s142
      %p146 = pneg %p140
      %p147 = scmp.eq.s32.totalorder %s22, 1
      %p148 = por %p146, %p147
      %p149 = scmp.ne.s32.totalorder %s141, %s144
      %p150 = scmp.eq.s32.totalorder %s22, 0
      %p151 = por %p149, %p150
      %p152 = scmp.ne.s32.totalorder %s141, %s144
      %p153 = scmp.eq.s32.totalorder %s27, 1
      %p154 = por %p152, %p153
      %p155 = scmp.ne.s32.totalorder %s144, %s145
      %p156 = scmp.eq.s32.totalorder %s27, 0
      %p157 = por %p155, %p156
      %p158 = scmp.ne.s32.totalorder %s144, %s145
      %p159 = scmp.eq.s32.totalorder %s28, 1
      %p160 = por %p158, %p159
      %p162 = scmp.ne.s32.totalorder %s145, %s161
      %p163 = scmp.eq.s32.totalorder %s28, 0
      %p164 = por %p162, %p163
      %s166 = sadd.s32 %s165, 1
      %p169 = scmp.eq.s32.totalorder %s22, 1
      %p170 = scmp.ne.s32.totalorder %s165, %s167
      %p171 = scmp.eq.s32.totalorder %s22, 0
      %p172 = por %p170, %p171
      %p173 = scmp.ne.s32.totalorder %s165, %s167
      %p174 = scmp.eq.s32.totalorder %s27, 1
      %p175 = por %p173, %p174
      %p176 = scmp.ne.s32.totalorder %s167, %s168
      %p177 = scmp.eq.s32.totalorder %s27, 0
      %p178 = por %p176, %p177
      %p179 = scmp.ne.s32.totalorder %s167, %s168
      %p180 = scmp.eq.s32.totalorder %s28, 1
      %p181 = por %p179, %p180
      %p183 = scmp.ne.s32.totalorder %s168, %s182
      %p184 = scmp.eq.s32.totalorder %s28, 0
      %p185 = por %p183, %p184
      %s187 = sadd.s32 %s186, 1
      %p190 = scmp.eq.s32.totalorder %s22, 1
      %p191 = scmp.ne.s32.totalorder %s186, %s188
      %p192 = scmp.eq.s32.totalorder %s22, 0
      %p193 = por %p191, %p192
      %p194 = scmp.ne.s32.totalorder %s186, %s188
      %p195 = scmp.eq.s32.totalorder %s27, 1
      %p196 = por %p194, %p195
      %p197 = scmp.ne.s32.totalorder %s188, %s189
      %p198 = scmp.eq.s32.totalorder %s27, 0
      %p199 = por %p197, %p198
      %p200 = scmp.ne.s32.totalorder %s188, %s189
      %p201 = scmp.eq.s32.totalorder %s28, 1
      %p202 = por %p200, %p201
      %p204 = scmp.ne.s32.totalorder %s189, %s203
      %p205 = scmp.eq.s32.totalorder %s28, 0
      %p206 = por %p204, %p205
      %s208 = sadd.s32 %s207, 1
      %p211 = scmp.eq.s32.totalorder %s22, 1
      %p212 = scmp.ne.s32.totalorder %s207, %s209
      %p213 = scmp.eq.s32.totalorder %s22, 0
      %p214 = por %p212, %p213
      %p215 = scmp.ne.s32.totalorder %s207, %s209
      %p216 = scmp.eq.s32.totalorder %s27, 1
      %p217 = por %p215, %p216
      %p218 = scmp.ne.s32.totalorder %s209, %s210
      %p219 = scmp.eq.s32.totalorder %s27, 0
      %p220 = por %p218, %p219
      %p221 = scmp.ne.s32.totalorder %s209, %s210
      %p222 = scmp.eq.s32.totalorder %s28, 1
      %p223 = por %p221, %p222
      %p225 = scmp.ne.s32.totalorder %s210, %s224
      %p226 = scmp.eq.s32.totalorder %s28, 0
      %p227 = por %p225, %p226
      %s229 = sadd.s32 %s228, 1
      %p232 = scmp.eq.s32.totalorder %s22, 1
      %p233 = scmp.ne.s32.totalorder %s228, %s230
      %p234 = scmp.eq.s32.totalorder %s22, 0
      %p235 = por %p233, %p234
      %p236 = scmp.ne.s32.totalorder %s228, %s230
      %p237 = scmp.eq.s32.totalorder %s27, 1
      %p238 = por %p236, %p237
      %p239 = scmp.ne.s32.totalorder %s230, %s231
      %p240 = scmp.eq.s32.totalorder %s27, 0
      %p241 = por %p239, %p240
      %p242 = scmp.ne.s32.totalorder %s230, %s231
      %p243 = scmp.eq.s32.totalorder %s28, 1
      %p244 = por %p242, %p243
      %p246 = scmp.ne.s32.totalorder %s231, %s245
      %p247 = scmp.eq.s32.totalorder %s28, 0
      %p248 = por %p246, %p247
      %s250 = sadd.s32 %s249, 1
      %p253 = scmp.eq.s32.totalorder %s22, 1
      %p254 = scmp.ne.s32.totalorder %s249, %s251
      %p255 = scmp.eq.s32.totalorder %s22, 0
      %p256 = por %p254, %p255
      %p257 = scmp.ne.s32.totalorder %s249, %s251
      %p258 = scmp.eq.s32.totalorder %s27, 1
      %p259 = por %p257, %p258
      %p260 = scmp.ne.s32.totalorder %s251, %s252
      %p261 = scmp.eq.s32.totalorder %s27, 0
      %p262 = por %p260, %p261
      %p263 = scmp.ne.s32.totalorder %s251, %s252
      %p264 = scmp.eq.s32.totalorder %s28, 1
      %p265 = por %p263, %p264
      %p267 = scmp.ne.s32.totalorder %s252, %s266
      %p268 = scmp.eq.s32.totalorder %s28, 0
      %p269 = por %p267, %p268
      %s271 = sadd.s32 %s270, 1
      %p274 = scmp.eq.s32.totalorder %s22, 1
      %p275 = scmp.ne.s32.totalorder %s270, %s272
      %p276 = scmp.eq.s32.totalorder %s22, 0
      %p277 = por %p275, %p276
      %p278 = scmp.ne.s32.totalorder %s270, %s272
      %p279 = scmp.eq.s32.totalorder %s27, 1
      %p280 = por %p278, %p279
      %p281 = scmp.ne.s32.totalorder %s272, %s273
      %p282 = scmp.eq.s32.totalorder %s27, 0
      %p283 = por %p281, %p282
      %p284 = scmp.ne.s32.totalorder %s272, %s273
      %p285 = scmp.eq.s32.totalorder %s28, 1
      %p286 = por %p284, %p285
      %p288 = scmp.ne.s32.totalorder %s273, %s287
      %p289 = scmp.eq.s32.totalorder %s28, 0
      %p290 = por %p288, %p289
      %s291 = ssub.s32 %s29, %s48
      %s292 = ssub.s32 %s30, %s44
      %s293 = sor.u32 %s291, %s292
      %s294 = ssub.s32 %s31, %s40
      %s295 = sor.u32 %s293, %s294
      %p296 = scmp.eq.s32.totalorder %s295, 0
      %s298 = sadd.s32 %s297, 1
      %s299 = scalar_select %p296, %s297, %s298
      %p302 = pneg %p296
      %p303 = scmp.eq.s32.totalorder %s22, 1
      %p304 = por %p302, %p303
      %p305 = scmp.ne.s32.totalorder %s297, %s300
      %p306 = scmp.eq.s32.totalorder %s22, 0
      %p307 = por %p305, %p306
      %p308 = scmp.ne.s32.totalorder %s297, %s300
      %p309 = scmp.eq.s32.totalorder %s27, 1
      %p310 = por %p308, %p309
      %p311 = scmp.ne.s32.totalorder %s300, %s301
      %p312 = scmp.eq.s32.totalorder %s27, 0
      %p313 = por %p311, %p312
      %p314 = scmp.ne.s32.totalorder %s300, %s301
      %p315 = scmp.eq.s32.totalorder %s28, 1
      %p316 = por %p314, %p315
      %p318 = scmp.ne.s32.totalorder %s301, %s317
      %p319 = scmp.eq.s32.totalorder %s28, 0
      %p320 = por %p318, %p319
      %p321 = scmp.le.s32.totalorder 1, %s22
      %p322 = scmp.lt.s32.totalorder %s22, 3
      %p323 = pnand %p321, %p322
      %p324 = pneg %p323
      // Predicated region
      $region9: #{recycling_embedder_forward.2} parent=5 // pred_check
        _
      $region10: #{recycling_embedder_forward.2} parent=5 // pred_check_branch
        %326 = sbr.rel (%p323) target = $region12
      $region11: #{recycling_embedder_forward.2} parent=5 // pred_region
        %s327 = ssub.s32 %s22, 1
        // Predicated region
        $region13: #{recycling_embedder_forward.2} parent=11 // pred_check
          %p328 = pneg %p178
        $region14: #{recycling_embedder_forward.2} parent=11 // pred_check_branch
          %330 = sbr.rel (%p328) target = $region16
        $region15: #{recycling_embedder_forward.2} parent=11 // pred_region
          _
        $region16: #{recycling_embedder_forward.2} parent=11 // pred_fallthru
          _
        // Predicated region
        $region17: #{recycling_embedder_forward.2} parent=11 // pred_check
          %p331 = pneg %p199
        $region18: #{recycling_embedder_forward.2} parent=11 // pred_check_branch
          %333 = sbr.rel (%p331) target = $region20
        $region19: #{recycling_embedder_forward.2} parent=11 // pred_region
          _
        $region20: #{recycling_embedder_forward.2} parent=11 // pred_fallthru
          _
        // Predicated region
        $region21: #{recycling_embedder_forward.2} parent=11 // pred_check
          %p334 = pneg %p220
        $region22: #{recycling_embedder_forward.2} parent=11 // pred_check_branch
          %336 = sbr.rel (%p334) target = $region24
        $region23: #{recycling_embedder_forward.2} parent=11 // pred_region
          _
        $region24: #{recycling_embedder_forward.2} parent=11 // pred_fallthru
          _
        // Predicated region
        $region25: #{recycling_embedder_forward.2} parent=11 // pred_check
          %p337 = pneg %p241
        $region26: #{recycling_embedder_forward.2} parent=11 // pred_check_branch
          %339 = sbr.rel (%p337) target = $region28
        $region27: #{recycling_embedder_forward.2} parent=11 // pred_region
          _
        $region28: #{recycling_embedder_forward.2} parent=11 // pred_fallthru
          _
        // Predicated region
        $region29: #{recycling_embedder_forward.2} parent=11 // pred_check
          %p340 = pneg %p262
        $region30: #{recycling_embedder_forward.2} parent=11 // pred_check_branch
          %342 = sbr.rel (%p340) target = $region32
        $region31: #{recycling_embedder_forward.2} parent=11 // pred_region
          _
        $region32: #{recycling_embedder_forward.2} parent=11 // pred_fallthru
          _
        // Predicated region
        $region33: #{recycling_embedder_forward.2} parent=11 // pred_check
          %p343 = pneg %p283
        $region34: #{recycling_embedder_forward.2} parent=11 // pred_check_branch
          %345 = sbr.rel (%p343) target = $region36
        $region35: #{recycling_embedder_forward.2} parent=11 // pred_region
          _
        $region36: #{recycling_embedder_forward.2} parent=11 // pred_fallthru
          _
      $region12: #{recycling_embedder_forward.2} parent=5 // pred_fallthru
        _
      %p346 = scmp.lt.s32.totalorder %s22, 2
      // Predicated region
      $region37: #{recycling_embedder_forward.2} parent=5 // pred_check
        %p347 = pneg %p346
      $region38: #{recycling_embedder_forward.2} parent=5 // pred_check_branch
        %349 = sbr.rel (%p347) target = $region40
      $region39: #{recycling_embedder_forward.2} parent=5 // pred_region
        // Predicated region
        $region41: #{recycling_embedder_forward.2} parent=39 // pred_check
          %p350 = pneg %p63
        $region42: #{recycling_embedder_forward.2} parent=39 // pred_check_branch
          %352 = sbr.rel (%p350) target = $region44
        $region43: #{recycling_embedder_forward.2} parent=39 // pred_region
          %p353 = scmp.lt.s32.totalorder %s29, 1
          %s354 = scalar_select %p353, %s29, 1
          %p355 = scmp.lt.s32.totalorder %s30, 0
          %s356 = scalar_select %p355, %s30, 0
          %s357 = sadd.s32 %s356, %s354
          %s358 = smul.addr %s357, 8
          %s359 = scalar_lea.vmem %s0, %s358
        $region44: #{recycling_embedder_forward.2} parent=39 // pred_fallthru
          _
        // Predicated region
        $region45: #{recycling_embedder_forward.2} parent=39 // pred_check
          %p360 = pneg %p91
        $region46: #{recycling_embedder_forward.2} parent=39 // pred_check_branch
          %362 = sbr.rel (%p360) target = $region48
        $region47: #{recycling_embedder_forward.2} parent=39 // pred_region
          %p363 = scmp.lt.s32.totalorder %s29, 1
          %s364 = scalar_select %p363, %s29, 1
          %p365 = scmp.lt.s32.totalorder %s31, 0
          %s366 = scalar_select %p365, %s31, 0
          %s367 = sadd.s32 %s366, %s364
          %s368 = smul.addr %s367, 4
          %s369 = scalar_lea.vmem %s1, %s368
        $region48: #{recycling_embedder_forward.2} parent=39 // pred_fallthru
          _
        // Predicated region
        $region49: #{recycling_embedder_forward.2} parent=39 // pred_check
          %p370 = pneg %p121
        $region50: #{recycling_embedder_forward.2} parent=39 // pred_check_branch
          %372 = sbr.rel (%p370) target = $region52
        $region51: #{recycling_embedder_forward.2} parent=39 // pred_region
          %s373 = smul.u32 8, %s30
          %p374 = scmp.lt.s32.totalorder %s29, 1
          %s375 = scalar_select %p374, %s29, 1
          %p376 = scmp.lt.s32.totalorder %s373, 7
          %s377 = scalar_select %p376, %s373, 7
          %p378 = scmp.lt.s32.totalorder %s31, 0
          %s379 = scalar_select %p378, %s31, 0
          %s380 = sadd.s32 %s379, %s377
          %s381 = smul.addr %s375, 8
          %s382 = sadd.s32 %s380, %s381
          %s383 = smul.addr %s382, 8
          %s384 = scalar_lea.vmem %s2, %s383
          %s385 = smul.u32 8, %s30
        $region52: #{recycling_embedder_forward.2} parent=39 // pred_fallthru
          _
        // Predicated region
        $region53: #{recycling_embedder_forward.2} parent=39 // pred_check
          %p386 = pneg %p151
        $region54: #{recycling_embedder_forward.2} parent=39 // pred_check_branch
          %388 = sbr.rel (%p386) target = $region56
        $region55: #{recycling_embedder_forward.2} parent=39 // pred_region
          %s389 = sand.u32 %s141, 1
          %s390 = scalar_lea.sflag [#allocation3], %s389
          %s391 = sand.u32 %s141, 1
          %s392 = smul.addr %s391, 64
          %s393 = scalar_lea.vmem [#allocation2], %s392
          %s394 = smul.u32 8, %s30
          %s396 = ssub.s32 1024, 1024
          %397 = vsyncadd %s390, %s396
          %s398 = sadd.s32 %s31, %s394
          %s399 = smul.addr %s29, 8
          %s400 = sadd.s32 %s398, %s399
          %s401 = smul.addr %s400, 128
          %s402 = scalar_lea.hbm %s3, %s401
          %s403 = sshll.u32 %s393, 4
          %s404 = int_to_ptr.vmem [resolvable:$true] %s403
          %409 = dma.hbm_to_vmem [thread:$0]  %s402, 1024, %s404, %s390, 128, 128, 8
        $region56: #{recycling_embedder_forward.2} parent=39 // pred_fallthru
          _
      $region40: #{recycling_embedder_forward.2} parent=5 // pred_fallthru
        _
      %p410 = scmp.le.s32.totalorder 1, %s22
      %p411 = scmp.lt.s32.totalorder %s22, 3
      %p412 = pnand %p410, %p411
      %p413 = pneg %p412
      // Predicated region
      $region57: #{recycling_embedder_forward.2} parent=5 // pred_check
        _
      $region58: #{recycling_embedder_forward.2} parent=5 // pred_check_branch
        %415 = sbr.rel (%p412) target = $region60
      $region59: #{recycling_embedder_forward.2} parent=5 // pred_region
        %s416 = ssub.s32 %s22, 1
        %s417 = sand.u32 %s144, 1
        %s418 = scalar_lea.sflag [#allocation3], %s417
        %s419 = sand.u32 %s144, 1
        %s420 = smul.addr %s419, 64
        %s421 = scalar_lea.vmem [#allocation2], %s420
        // Predicated region
        $region61: #{recycling_embedder_forward.2} parent=59 // pred_check
          %p422 = pneg %p157
        $region62: #{recycling_embedder_forward.2} parent=59 // pred_check_branch
          %424 = sbr.rel (%p422) target = $region64
        $region63: #{recycling_embedder_forward.2} parent=59 // pred_region
          %425 = dma.done %s418, 1024
        $region64: #{recycling_embedder_forward.2} parent=59 // pred_fallthru
          _
        %p426 = scmp.lt.s32.totalorder %s32, 1
        %s427 = scalar_select %p426, %s32, 1
        %p428 = scmp.lt.s32.totalorder %s33, 0
        %s429 = scalar_select %p428, %s33, 0
        %s430 = sadd.s32 %s429, %s427
        %s431 = smul.addr %s430, 8
        %s432 = scalar_lea.vmem %s0, %s431
        %p433 = pneg %p69
        %p434 = pneg %p66
        %p435 = scmp.lt.s32.totalorder %s32, 1
        %s436 = scalar_select %p435, %s32, 1
        %p437 = scmp.lt.s32.totalorder %s34, 0
        %s438 = scalar_select %p437, %s34, 0
        %s439 = sadd.s32 %s438, %s436
        %s440 = smul.addr %s439, 4
        %s441 = scalar_lea.vmem %s1, %s440
        %p442 = pneg %p97
        %p443 = pneg %p94
        %s444 = smul.u32 8, %s33
        %p445 = scmp.lt.s32.totalorder %s32, 1
        %s446 = scalar_select %p445, %s32, 1
        %p447 = scmp.lt.s32.totalorder %s444, 7
        %s448 = scalar_select %p447, %s444, 7
        %p449 = scmp.lt.s32.totalorder %s34, 0
        %s450 = scalar_select %p449, %s34, 0
        %s451 = sadd.s32 %s450, %s448
        %s452 = smul.addr %s446, 8
        %s453 = sadd.s32 %s451, %s452
        %s454 = smul.addr %s453, 8
        %s455 = scalar_lea.vmem %s2, %s454
        %p456 = pneg %p127
        %p457 = pneg %p124
        %s458 = sand.u32 %s144, 1
        %s459 = scalar_lea.sflag [#allocation3], %s458
        %s460 = sand.u32 %s144, 1
        %s461 = smul.addr %s460, 64
        %s462 = scalar_lea.vmem [#allocation2], %s461
        %p463 = pneg %p157
        %p464 = pneg %p154
        %p465 = pneg %p178
        %p466 = pneg %p175
        %p467 = pneg %p199
        %p468 = pneg %p196
        %p469 = pneg %p220
        %p470 = pneg %p217
        %p471 = pneg %p241
        %p472 = pneg %p238
        %p473 = pneg %p262
        %p474 = pneg %p259
        %p475 = pneg %p283
        %p476 = pneg %p280
        %p477 = pneg %p313
        %p478 = pneg %p310
        %s479 = sand.u32 %s300, 1
        %s480 = scalar_lea.sflag [#allocation4], %s479
        %s481 = sand.u32 %s300, 1
        %s482 = smul.addr %s481, 64
        %s483 = scalar_lea.vmem [#allocation5], %s482
        %p484 = scmp.lt.s32.totalorder %s32, 1
        %s485 = scalar_select %p484, %s32, 1
        %p486 = scmp.lt.s32.totalorder %s33, 0
        %s487 = scalar_select %p486, %s33, 0
        %s488 = sadd.s32 %s487, %s485
        %s489 = smul.addr %s488, 8
        %s490 = scalar_lea.vmem %s0, %s489
        %p491 = scmp.lt.s32.totalorder %s32, 1
        %s492 = scalar_select %p491, %s32, 1
        %p493 = scmp.lt.s32.totalorder %s34, 0
        %s494 = scalar_select %p493, %s34, 0
        %s495 = sadd.s32 %s494, %s492
        %s496 = smul.addr %s495, 4
        %s497 = scalar_lea.vmem %s1, %s496
        %s498 = smul.u32 8, %s33
        %p499 = scmp.lt.s32.totalorder %s32, 1
        %s500 = scalar_select %p499, %s32, 1
        %p501 = scmp.lt.s32.totalorder %s498, 7
        %s502 = scalar_select %p501, %s498, 7
        %p503 = scmp.lt.s32.totalorder %s34, 0
        %s504 = scalar_select %p503, %s34, 0
        %s505 = sadd.s32 %s504, %s502
        %s506 = smul.addr %s500, 8
        %s507 = sadd.s32 %s505, %s506
        %s508 = smul.addr %s507, 8
        %s509 = scalar_lea.vmem %s2, %s508
        %s510 = smul.u32 8, %s33
        %s511 = smul.u32 8, %s33
        %s512 = smul.u32 8, %s33
        %v513 = vld [vmem:[%s490] sm:$0xff]
        %v514 = vld [vmem:[%s497] sm:$0x7]
        %516 = vset.pattern.permute.xlu0 0
        %517 = vperm.xlu0 %516, %v513
        %v518 = vpop.permute.xlu0 %517
        %v520 = vlaneseq
        %v521 = vshrl.u32 %v520, 7
        %v522 = vsub.s32 0, %v521
        %v523 = vrot.slane %v514, %v522
        %v524 = vsub.f32 %v518, %v523
        %v525 = vmul.f32 %v524, %v524
        %526 = vset.pattern.permute.xlu0 1
        %527 = vperm.xlu0 %526, %v513
        %v528 = vpop.permute.xlu0 %527
        %v530 = vlaneseq
        %v531 = vshrl.u32 %v530, 7
        %v532 = vsub.s32 1, %v531
        %v533 = vrot.slane %v514, %v532
        %v534 = vsub.f32 %v528, %v533
        %v535 = vmul.f32 %v534, %v534
        %v536 = vadd.f32 %v525, %v535
        %537 = vset.pattern.permute.xlu0 2
        %538 = vperm.xlu0 %537, %v513
        %v539 = vpop.permute.xlu0 %538
        %v541 = vlaneseq
        %v542 = vshrl.u32 %v541, 7
        %v543 = vsub.s32 2, %v542
        %v544 = vrot.slane %v514, %v543
        %v545 = vsub.f32 %v539, %v544
        %v546 = vmul.f32 %v545, %v545
        %v547 = vadd.f32 %v536, %v546
        %v548 = vlaneseq
        %v549 = vshrl.u32 %v548, 7
        %v550 = vsub.s32 0, %v549
        %v551 = vrot.slane %v547, %v550
        %553 = vbcast.lane.b32.xlu0 %v551, 256
        %v554 = vpop.permute.xlu0 %553
        %v555 = vlaneseq
        %v556 = vshrl.u32 %v555, 7
        %v557 = vsub.s32 1, %v556
        %v558 = vrot.slane %v547, %v557
        %560 = vbcast.lane.b32.xlu0 %v558, 256
        %v561 = vpop.permute.xlu0 %560
        %v562 = vlaneseq
        %v563 = vshrl.u32 %v562, 7
        %v564 = vsub.s32 2, %v563
        %v565 = vrot.slane %v547, %v564
        %567 = vbcast.lane.b32.xlu0 %v565, 256
        %v568 = vpop.permute.xlu0 %567
        %v569 = vlaneseq
        %v570 = vshrl.u32 %v569, 7
        %v571 = vsub.s32 3, %v570
        %v572 = vrot.slane %v547, %v571
        %574 = vbcast.lane.b32.xlu0 %v572, 256
        %v575 = vpop.permute.xlu0 %574
        %v576 = vlaneseq
        %v577 = vshrl.u32 %v576, 7
        %v578 = vsub.s32 4, %v577
        %v579 = vrot.slane %v547, %v578
        %581 = vbcast.lane.b32.xlu0 %v579, 256
        %v582 = vpop.permute.xlu0 %581
        %v583 = vlaneseq
        %v584 = vshrl.u32 %v583, 7
        %v585 = vsub.s32 5, %v584
        %v586 = vrot.slane %v547, %v585
        %588 = vbcast.lane.b32.xlu0 %v586, 256
        %v589 = vpop.permute.xlu0 %588
        %v590 = vlaneseq
        %v591 = vshrl.u32 %v590, 7
        %v592 = vsub.s32 6, %v591
        %v593 = vrot.slane %v547, %v592
        %595 = vbcast.lane.b32.xlu0 %v593, 256
        %v596 = vpop.permute.xlu0 %595
        %v597 = vlaneseq
        %v598 = vshrl.u32 %v597, 7
        %v599 = vsub.s32 7, %v598
        %v600 = vrot.slane %v547, %v599
        %602 = vbcast.lane.b32.xlu0 %v600, 256
        %v603 = vpop.permute.xlu0 %602
        %v604 = vld [vmem:[%s4] sm:$0x1]
        %v606 = vlaneseq
        %v607 = vshrl.u32 %v606, 7
        %v608 = vsub.s32 0, %v607
        %v609 = vrot.slane %v604, %v608
        %vm611 = vcmp.gt.f32.partialorder %v554, %v609
        %vm612 = vcmp.gt.f32.partialorder %v561, %v609
        %vm613 = vcmp.gt.f32.partialorder %v568, %v609
        %vm614 = vcmp.gt.f32.partialorder %v575, %v609
        %vm615 = vcmp.gt.f32.partialorder %v582, %v609
        %vm616 = vcmp.gt.f32.partialorder %v589, %v609
        %vm617 = vcmp.gt.f32.partialorder %v596, %v609
        %vm618 = vcmp.gt.f32.partialorder %v603, %v609
        %v619 = vld [vmem:[%s5] sm:$0x1]
        %v621 = vlaneseq
        %v622 = vshrl.u32 %v621, 7
        %v623 = vsub.s32 0, %v622
        %v624 = vrot.slane %v619, %v623
        %vm626 = vcmp.lt.f32.partialorder %v554, %v624
        %vm627 = vcmp.lt.f32.partialorder %v561, %v624
        %vm628 = vcmp.lt.f32.partialorder %v568, %v624
        %vm629 = vcmp.lt.f32.partialorder %v575, %v624
        %vm630 = vcmp.lt.f32.partialorder %v582, %v624
        %vm631 = vcmp.lt.f32.partialorder %v589, %v624
        %vm632 = vcmp.lt.f32.partialorder %v596, %v624
        %vm633 = vcmp.lt.f32.partialorder %v603, %v624
        %vm634 = vmand %vm611, %vm626
        %vm635 = vmand %vm612, %vm627
        %vm636 = vmand %vm613, %vm628
        %vm637 = vmand %vm614, %vm629
        %vm638 = vmand %vm615, %vm630
        %vm639 = vmand %vm616, %vm631
        %vm640 = vmand %vm617, %vm632
        %vm641 = vmand %vm618, %vm633
        %v642 = vsel %vm634, 1, 0
        %v643 = vsel %vm635, 1, 0
        %v644 = vsel %vm636, 1, 0
        %v645 = vsel %vm637, 1, 0
        %v646 = vsel %vm638, 1, 0
        %v647 = vsel %vm639, 1, 0
        %v648 = vsel %vm640, 1, 0
        %v649 = vsel %vm641, 1, 0
        %v650 = vcvt.s32.f32 %v642
        %v651 = vcvt.s32.f32 %v643
        %v652 = vcvt.s32.f32 %v644
        %v653 = vcvt.s32.f32 %v645
        %v654 = vcvt.s32.f32 %v646
        %v655 = vcvt.s32.f32 %v647
        %v656 = vcvt.s32.f32 %v648
        %v657 = vcvt.s32.f32 %v649
        %v658 = vld [vmem:[%s6] sm:$0xff]
        %v659 = vld [vmem:[%s6 + $0x8] sm:$0x7f]
        %vm660 = vcmask 121856
        %v662 = vsel %vm660, %v650, 0
        %v665 = vsel %vm660, %v651, 0
        %v668 = vsel %vm660, %v652, 0
        %v671 = vsel %vm660, %v653, 0
        %v674 = vsel %vm660, %v654, 0
        %v677 = vsel %vm660, %v655, 0
        %v680 = vsel %vm660, %v656, 0
        %v683 = vsel %vm660, %v657, 0
        %vm685 = vcmask 1046528
        %v687 = vsel %vm685, %v659, 0
        %689 = vmatprep.subr.mxu0 0.0
        %690 = vmatpush1.msra.mxu0 0.0
        %691 = vmatprep.subr.mxu0 0.0
        %692 = vmatpush1.msra.mxu0 0.0
        %693 = vmatprep.subr.mxu0 0.0
        %694 = vmatpush1.msra.mxu0 0.0
        %695 = vmatprep.subr.mxu0 0.0
        %696 = vmatpush1.msra.mxu0 0.0
        %697 = vmatprep.subr.mxu0 0.0
        %698 = vmatpush1.msra.mxu0 0.0
        %699 = vmatprep.subr.mxu0 0.0
        %700 = vmatpush1.msra.mxu0 0.0
        %701 = vmatprep.subr.mxu0 0.0
        %702 = vmatpush1.msra.mxu0 0.0
        %703 = vmatprep.subr.mxu0 0.0
        %704 = vmatpush1.msra.mxu0 0.0
        %705 = vmatprep.subr.mxu0 0.0
        %706 = vmatpush1.msra.mxu0 0.0
        %707 = vmatprep.subr.mxu0 0.0
        %708 = vmatpush1.msra.mxu0 0.0
        %709 = vmatprep.subr.mxu0 0.0
        %710 = vmatpush1.msra.mxu0 0.0
        %711 = vmatprep.subr.mxu0 0.0
        %712 = vmatpush1.msra.mxu0 0.0
        %713 = vmatprep.subr.mxu0 0.0
        %714 = vmatpush1.msra.mxu0 0.0
        %715 = vmatprep.subr.mxu0 0.0
        %716 = vmatpush1.msra.mxu0 0.0
        %717 = vmatprep.subr.mxu0 0.0
        %v718 = vand.u32 %v687, 4294901760
        %719 = vmatpush1.msra.mxu0 %v718
        %720 = vmatprep.subr.mxu0 0.0
        %v721 = vand.u32 %v658, 4294901760
        %722 = vmatpush1.msra.mxu0 %v721
        %723 = vmatprep.subr.mxu0 0.0
        %724 = vmatpush2.msra.mxu0 0.0
        %725 = vmatprep.subr.mxu0 0.0
        %726 = vmatpush2.msra.mxu0 0.0
        %727 = vmatprep.subr.mxu0 0.0
        %728 = vmatpush2.msra.mxu0 0.0
        %729 = vmatprep.subr.mxu0 0.0
        %730 = vmatpush2.msra.mxu0 0.0
        %731 = vmatprep.subr.mxu0 0.0
        %732 = vmatpush2.msra.mxu0 0.0
        %733 = vmatprep.subr.mxu0 0.0
        %734 = vmatpush2.msra.mxu0 0.0
        %735 = vmatprep.subr.mxu0 0.0
        %736 = vmatpush2.msra.mxu0 0.0
        %737 = vmatprep.subr.mxu0 0.0
        %738 = vmatpush2.msra.mxu0 0.0
        %739 = vmatprep.subr.mxu0 0.0
        %740 = vmatpush2.msra.mxu0 0.0
        %741 = vmatprep.subr.mxu0 0.0
        %742 = vmatpush2.msra.mxu0 0.0
        %743 = vmatprep.subr.mxu0 0.0
        %744 = vmatpush2.msra.mxu0 0.0
        %745 = vmatprep.subr.mxu0 0.0
        %746 = vmatpush2.msra.mxu0 0.0
        %747 = vmatprep.subr.mxu0 0.0
        %748 = vmatpush2.msra.mxu0 0.0
        %749 = vmatprep.subr.mxu0 0.0
        %750 = vmatpush2.msra.mxu0 0.0
        %751 = vmatprep.subr.mxu0 0.0
        %752 = vmatpush2.msra.mxu0 0.0
        %753 = vmatprep.subr.mxu0 0.0
        %754 = vmatpush2.msra.mxu0 0.0
        %755 = vmatprep.mubr.f32.mxu0 0.0
        %v756 = vand.u32 %v662, 4294901760
        %v757 = vsub.f32 %v662, %v756
        %v758 = vand.u32 %v757, 4294901760
        %v759 = vsub.f32 %v757, %v758
        %v760 = vand.u32 %v759, 4294901760
        %761 = vmatmul.mubr.f32.gmra.mxu0 %v760
        %v762 = vpop.f32.mrf.mxu0
        %v763 = vadd.f32 0.0, %v762
        %v764 = vpop.f32.mrf.mxu0
        %765 = vmatprep.mubr.f32.mxu0 0.0
        %v766 = vand.u32 %v665, 4294901760
        %v767 = vsub.f32 %v665, %v766
        %v768 = vand.u32 %v767, 4294901760
        %v769 = vsub.f32 %v767, %v768
        %v770 = vand.u32 %v769, 4294901760
        %771 = vmatmul.mubr.f32.gmra.mxu0 %v770
        %v772 = vpop.f32.mrf.mxu0
        %v773 = vadd.f32 0.0, %v772
        %v774 = vpop.f32.mrf.mxu0
        %775 = vmatprep.mubr.f32.mxu0 0.0
        %v776 = vand.u32 %v668, 4294901760
        %v777 = vsub.f32 %v668, %v776
        %v778 = vand.u32 %v777, 4294901760
        %v779 = vsub.f32 %v777, %v778
        %v780 = vand.u32 %v779, 4294901760
        %781 = vmatmul.mubr.f32.gmra.mxu0 %v780
        %v782 = vpop.f32.mrf.mxu0
        %v783 = vadd.f32 0.0, %v782
        %v784 = vpop.f32.mrf.mxu0
        %785 = vmatprep.mubr.f32.mxu0 0.0
        %v786 = vand.u32 %v671, 4294901760
        %v787 = vsub.f32 %v671, %v786
        %v788 = vand.u32 %v787, 4294901760
        %v789 = vsub.f32 %v787, %v788
        %v790 = vand.u32 %v789, 4294901760
        %791 = vmatmul.mubr.f32.gmra.mxu0 %v790
        %v792 = vpop.f32.mrf.mxu0
        %v793 = vadd.f32 0.0, %v792
        %v794 = vpop.f32.mrf.mxu0
        %795 = vmatprep.mubr.f32.mxu0 0.0
        %v796 = vand.u32 %v674, 4294901760
        %v797 = vsub.f32 %v674, %v796
        %v798 = vand.u32 %v797, 4294901760
        %v799 = vsub.f32 %v797, %v798
        %v800 = vand.u32 %v799, 4294901760
        %801 = vmatmul.mubr.f32.gmra.mxu0 %v800
        %v802 = vpop.f32.mrf.mxu0
        %v803 = vadd.f32 0.0, %v802
        %v804 = vpop.f32.mrf.mxu0
        %805 = vmatprep.mubr.f32.mxu0 0.0
        %v806 = vand.u32 %v677, 4294901760
        %v807 = vsub.f32 %v677, %v806
        %v808 = vand.u32 %v807, 4294901760
        %v809 = vsub.f32 %v807, %v808
        %v810 = vand.u32 %v809, 4294901760
        %811 = vmatmul.mubr.f32.gmra.mxu0 %v810
        %v812 = vpop.f32.mrf.mxu0
        %v813 = vadd.f32 0.0, %v812
        %v814 = vpop.f32.mrf.mxu0
        %815 = vmatprep.mubr.f32.mxu0 0.0
        %v816 = vand.u32 %v680, 4294901760
        %v817 = vsub.f32 %v680, %v816
        %v818 = vand.u32 %v817, 4294901760
        %v819 = vsub.f32 %v817, %v818
        %v820 = vand.u32 %v819, 4294901760
        %821 = vmatmul.mubr.f32.gmra.mxu0 %v820
        %v822 = vpop.f32.mrf.mxu0
        %v823 = vadd.f32 0.0, %v822
        %v824 = vpop.f32.mrf.mxu0
        %825 = vmatprep.mubr.f32.mxu0 0.0
        %v826 = vand.u32 %v683, 4294901760
        %v827 = vsub.f32 %v683, %v826
        %v828 = vand.u32 %v827, 4294901760
        %v829 = vsub.f32 %v827, %v828
        %v830 = vand.u32 %v829, 4294901760
        %831 = vmatmul.mubr.f32.gmra.mxu0 %v830
        %v832 = vpop.f32.mrf.mxu0
        %v833 = vadd.f32 0.0, %v832
        %v834 = vpop.f32.mrf.mxu0
        %835 = vdwg.mxu0
        %836 = vmatprep.subr.mxu0 0.0
        %837 = vmatpush1.msra.mxu0 0.0
        %838 = vmatprep.subr.mxu0 0.0
        %839 = vmatpush1.msra.mxu0 0.0
        %840 = vmatprep.subr.mxu0 0.0
        %841 = vmatpush1.msra.mxu0 0.0
        %842 = vmatprep.subr.mxu0 0.0
        %843 = vmatpush1.msra.mxu0 0.0
        %844 = vmatprep.subr.mxu0 0.0
        %845 = vmatpush1.msra.mxu0 0.0
        %846 = vmatprep.subr.mxu0 0.0
        %847 = vmatpush1.msra.mxu0 0.0
        %848 = vmatprep.subr.mxu0 0.0
        %849 = vmatpush1.msra.mxu0 0.0
        %850 = vmatprep.subr.mxu0 0.0
        %851 = vmatpush1.msra.mxu0 0.0
        %852 = vmatprep.subr.mxu0 0.0
        %853 = vmatpush1.msra.mxu0 0.0
        %854 = vmatprep.subr.mxu0 0.0
        %855 = vmatpush1.msra.mxu0 0.0
        %856 = vmatprep.subr.mxu0 0.0
        %857 = vmatpush1.msra.mxu0 0.0
        %858 = vmatprep.subr.mxu0 0.0
        %859 = vmatpush1.msra.mxu0 0.0
        %860 = vmatprep.subr.mxu0 0.0
        %861 = vmatpush1.msra.mxu0 0.0
        %862 = vmatprep.subr.mxu0 0.0
        %863 = vmatpush1.msra.mxu0 0.0
        %864 = vmatprep.subr.mxu0 0.0
        %v865 = vand.u32 %v687, 4294901760
        %v866 = vsub.f32 %v687, %v865
        %v867 = vand.u32 %v866, 4294901760
        %v868 = vsub.f32 %v866, %v867
        %v869 = vand.u32 %v868, 4294901760
        %870 = vmatpush1.msra.mxu0 %v869
        %871 = vmatprep.subr.mxu0 0.0
        %v872 = vand.u32 %v658, 4294901760
        %v873 = vsub.f32 %v658, %v872
        %v874 = vand.u32 %v873, 4294901760
        %v875 = vsub.f32 %v873, %v874
        %v876 = vand.u32 %v875, 4294901760
        %877 = vmatpush1.msra.mxu0 %v876
        %878 = vmatprep.subr.mxu0 0.0
        %879 = vmatpush2.msra.mxu0 0.0
        %880 = vmatprep.subr.mxu0 0.0
        %881 = vmatpush2.msra.mxu0 0.0
        %882 = vmatprep.subr.mxu0 0.0
        %883 = vmatpush2.msra.mxu0 0.0
        %884 = vmatprep.subr.mxu0 0.0
        %885 = vmatpush2.msra.mxu0 0.0
        %886 = vmatprep.subr.mxu0 0.0
        %887 = vmatpush2.msra.mxu0 0.0
        %888 = vmatprep.subr.mxu0 0.0
        %889 = vmatpush2.msra.mxu0 0.0
        %890 = vmatprep.subr.mxu0 0.0
        %891 = vmatpush2.msra.mxu0 0.0
        %892 = vmatprep.subr.mxu0 0.0
        %893 = vmatpush2.msra.mxu0 0.0
        %894 = vmatprep.subr.mxu0 0.0
        %895 = vmatpush2.msra.mxu0 0.0
        %896 = vmatprep.subr.mxu0 0.0
        %897 = vmatpush2.msra.mxu0 0.0
        %898 = vmatprep.subr.mxu0 0.0
        %899 = vmatpush2.msra.mxu0 0.0
        %900 = vmatprep.subr.mxu0 0.0
        %901 = vmatpush2.msra.mxu0 0.0
        %902 = vmatprep.subr.mxu0 0.0
        %903 = vmatpush2.msra.mxu0 0.0
        %904 = vmatprep.subr.mxu0 0.0
        %905 = vmatpush2.msra.mxu0 0.0
        %906 = vmatprep.subr.mxu0 0.0
        %907 = vmatpush2.msra.mxu0 0.0
        %908 = vmatprep.subr.mxu0 0.0
        %909 = vmatpush2.msra.mxu0 0.0
        %910 = vmatprep.mubr.f32.mxu0 0.0
        %v911 = vand.u32 %v662, 4294901760
        %912 = vmatmul.mubr.f32.gmra.mxu0 %v911
        %v913 = vpop.f32.mrf.mxu0
        %v914 = vadd.f32 %v763, %v913
        %v915 = vpop.f32.mrf.mxu0
        %916 = vmatprep.mubr.f32.mxu0 0.0
        %v917 = vand.u32 %v665, 4294901760
        %918 = vmatmul.mubr.f32.gmra.mxu0 %v917
        %v919 = vpop.f32.mrf.mxu0
        %v920 = vadd.f32 %v773, %v919
        %v921 = vpop.f32.mrf.mxu0
        %922 = vmatprep.mubr.f32.mxu0 0.0
        %v923 = vand.u32 %v668, 4294901760
        %924 = vmatmul.mubr.f32.gmra.mxu0 %v923
        %v925 = vpop.f32.mrf.mxu0
        %v926 = vadd.f32 %v783, %v925
        %v927 = vpop.f32.mrf.mxu0
        %928 = vmatprep.mubr.f32.mxu0 0.0
        %v929 = vand.u32 %v671, 4294901760
        %930 = vmatmul.mubr.f32.gmra.mxu0 %v929
        %v931 = vpop.f32.mrf.mxu0
        %v932 = vadd.f32 %v793, %v931
        %v933 = vpop.f32.mrf.mxu0
        %934 = vmatprep.mubr.f32.mxu0 0.0
        %v935 = vand.u32 %v674, 4294901760
        %936 = vmatmul.mubr.f32.gmra.mxu0 %v935
        %v937 = vpop.f32.mrf.mxu0
        %v938 = vadd.f32 %v803, %v937
        %v939 = vpop.f32.mrf.mxu0
        %940 = vmatprep.mubr.f32.mxu0 0.0
        %v941 = vand.u32 %v677, 4294901760
        %942 = vmatmul.mubr.f32.gmra.mxu0 %v941
        %v943 = vpop.f32.mrf.mxu0
        %v944 = vadd.f32 %v813, %v943
        %v945 = vpop.f32.mrf.mxu0
        %946 = vmatprep.mubr.f32.mxu0 0.0
        %v947 = vand.u32 %v680, 4294901760
        %948 = vmatmul.mubr.f32.gmra.mxu0 %v947
        %v949 = vpop.f32.mrf.mxu0
        %v950 = vadd.f32 %v823, %v949
        %v951 = vpop.f32.mrf.mxu0
        %952 = vmatprep.mubr.f32.mxu0 0.0
        %v953 = vand.u32 %v683, 4294901760
        %954 = vmatmul.mubr.f32.gmra.mxu0 %v953
        %v955 = vpop.f32.mrf.mxu0
        %v956 = vadd.f32 %v833, %v955
        %v957 = vpop.f32.mrf.mxu0
        %958 = vdwg.mxu0
        %959 = vmatprep.subr.mxu0 0.0
        %960 = vmatpush1.msra.mxu0 0.0
        %961 = vmatprep.subr.mxu0 0.0
        %962 = vmatpush1.msra.mxu0 0.0
        %963 = vmatprep.subr.mxu0 0.0
        %964 = vmatpush1.msra.mxu0 0.0
        %965 = vmatprep.subr.mxu0 0.0
        %966 = vmatpush1.msra.mxu0 0.0
        %967 = vmatprep.subr.mxu0 0.0
        %968 = vmatpush1.msra.mxu0 0.0
        %969 = vmatprep.subr.mxu0 0.0
        %970 = vmatpush1.msra.mxu0 0.0
        %971 = vmatprep.subr.mxu0 0.0
        %972 = vmatpush1.msra.mxu0 0.0
        %973 = vmatprep.subr.mxu0 0.0
        %974 = vmatpush1.msra.mxu0 0.0
        %975 = vmatprep.subr.mxu0 0.0
        %976 = vmatpush1.msra.mxu0 0.0
        %977 = vmatprep.subr.mxu0 0.0
        %978 = vmatpush1.msra.mxu0 0.0
        %979 = vmatprep.subr.mxu0 0.0
        %980 = vmatpush1.msra.mxu0 0.0
        %981 = vmatprep.subr.mxu0 0.0
        %982 = vmatpush1.msra.mxu0 0.0
        %983 = vmatprep.subr.mxu0 0.0
        %984 = vmatpush1.msra.mxu0 0.0
        %985 = vmatprep.subr.mxu0 0.0
        %986 = vmatpush1.msra.mxu0 0.0
        %987 = vmatprep.subr.mxu0 0.0
        %v988 = vand.u32 %v687, 4294901760
        %v989 = vsub.f32 %v687, %v988
        %990 = vmatpush1.msra.mxu0 %v989
        %991 = vmatprep.subr.mxu0 0.0
        %v992 = vand.u32 %v658, 4294901760
        %v993 = vsub.f32 %v658, %v992
        %994 = vmatpush1.msra.mxu0 %v993
        %995 = vmatprep.subr.mxu0 0.0
        %996 = vmatpush2.msra.mxu0 0.0
        %997 = vmatprep.subr.mxu0 0.0
        %998 = vmatpush2.msra.mxu0 0.0
        %999 = vmatprep.subr.mxu0 0.0
        %1000 = vmatpush2.msra.mxu0 0.0
        %1001 = vmatprep.subr.mxu0 0.0
        %1002 = vmatpush2.msra.mxu0 0.0
        %1003 = vmatprep.subr.mxu0 0.0
        %1004 = vmatpush2.msra.mxu0 0.0
        %1005 = vmatprep.subr.mxu0 0.0
        %1006 = vmatpush2.msra.mxu0 0.0
        %1007 = vmatprep.subr.mxu0 0.0
        %1008 = vmatpush2.msra.mxu0 0.0
        %1009 = vmatprep.subr.mxu0 0.0
        %1010 = vmatpush2.msra.mxu0 0.0
        %1011 = vmatprep.subr.mxu0 0.0
        %1012 = vmatpush2.msra.mxu0 0.0
        %1013 = vmatprep.subr.mxu0 0.0
        %1014 = vmatpush2.msra.mxu0 0.0
        %1015 = vmatprep.subr.mxu0 0.0
        %1016 = vmatpush2.msra.mxu0 0.0
        %1017 = vmatprep.subr.mxu0 0.0
        %1018 = vmatpush2.msra.mxu0 0.0
        %1019 = vmatprep.subr.mxu0 0.0
        %1020 = vmatpush2.msra.mxu0 0.0
        %1021 = vmatprep.subr.mxu0 0.0
        %1022 = vmatpush2.msra.mxu0 0.0
        %1023 = vmatprep.subr.mxu0 0.0
        %1024 = vmatpush2.msra.mxu0 0.0
        %1025 = vmatprep.subr.mxu0 0.0
        %1026 = vmatpush2.msra.mxu0 0.0
        %1027 = vmatprep.mubr.f32.mxu0 0.0
        %v1028 = vand.u32 %v662, 4294901760
        %v1029 = vsub.f32 %v662, %v1028
        %1030 = vmatmul.mubr.f32.gmra.mxu0 %v1029
        %v1031 = vpop.f32.mrf.mxu0
        %v1032 = vadd.f32 %v914, %v1031
        %v1033 = vpop.f32.mrf.mxu0
        %1034 = vmatprep.mubr.f32.mxu0 0.0
        %v1035 = vand.u32 %v665, 4294901760
        %v1036 = vsub.f32 %v665, %v1035
        %1037 = vmatmul.mubr.f32.gmra.mxu0 %v1036
        %v1038 = vpop.f32.mrf.mxu0
        %v1039 = vadd.f32 %v920, %v1038
        %v1040 = vpop.f32.mrf.mxu0
        %1041 = vmatprep.mubr.f32.mxu0 0.0
        %v1042 = vand.u32 %v668, 4294901760
        %v1043 = vsub.f32 %v668, %v1042
        %1044 = vmatmul.mubr.f32.gmra.mxu0 %v1043
        %v1045 = vpop.f32.mrf.mxu0
        %v1046 = vadd.f32 %v926, %v1045
        %v1047 = vpop.f32.mrf.mxu0
        %1048 = vmatprep.mubr.f32.mxu0 0.0
        %v1049 = vand.u32 %v671, 4294901760
        %v1050 = vsub.f32 %v671, %v1049
        %1051 = vmatmul.mubr.f32.gmra.mxu0 %v1050
        %v1052 = vpop.f32.mrf.mxu0
        %v1053 = vadd.f32 %v932, %v1052
        %v1054 = vpop.f32.mrf.mxu0
        %1055 = vmatprep.mubr.f32.mxu0 0.0
        %v1056 = vand.u32 %v674, 4294901760
        %v1057 = vsub.f32 %v674, %v1056
        %1058 = vmatmul.mubr.f32.gmra.mxu0 %v1057
        %v1059 = vpop.f32.mrf.mxu0
        %v1060 = vadd.f32 %v938, %v1059
        %v1061 = vpop.f32.mrf.mxu0
        %1062 = vmatprep.mubr.f32.mxu0 0.0
        %v1063 = vand.u32 %v677, 4294901760
        %v1064 = vsub.f32 %v677, %v1063
        %1065 = vmatmul.mubr.f32.gmra.mxu0 %v1064
        %v1066 = vpop.f32.mrf.mxu0
        %v1067 = vadd.f32 %v944, %v1066
        %v1068 = vpop.f32.mrf.mxu0
        %1069 = vmatprep.mubr.f32.mxu0 0.0
        %v1070 = vand.u32 %v680, 4294901760
        %v1071 = vsub.f32 %v680, %v1070
        %1072 = vmatmul.mubr.f32.gmra.mxu0 %v1071
        %v1073 = vpop.f32.mrf.mxu0
        %v1074 = vadd.f32 %v950, %v1073
        %v1075 = vpop.f32.mrf.mxu0
        %1076 = vmatprep.mubr.f32.mxu0 0.0
        %v1077 = vand.u32 %v683, 4294901760
        %v1078 = vsub.f32 %v683, %v1077
        %1079 = vmatmul.mubr.f32.gmra.mxu0 %v1078
        %v1080 = vpop.f32.mrf.mxu0
        %v1081 = vadd.f32 %v956, %v1080
        %v1082 = vpop.f32.mrf.mxu0
        %1083 = vdwg.mxu0
        %1084 = vmatprep.subr.mxu0 0.0
        %1085 = vmatpush1.msra.mxu0 0.0
        %1086 = vmatprep.subr.mxu0 0.0
        %1087 = vmatpush1.msra.mxu0 0.0
        %1088 = vmatprep.subr.mxu0 0.0
        %1089 = vmatpush1.msra.mxu0 0.0
        %1090 = vmatprep.subr.mxu0 0.0
        %1091 = vmatpush1.msra.mxu0 0.0
        %1092 = vmatprep.subr.mxu0 0.0
        %1093 = vmatpush1.msra.mxu0 0.0
        %1094 = vmatprep.subr.mxu0 0.0
        %1095 = vmatpush1.msra.mxu0 0.0
        %1096 = vmatprep.subr.mxu0 0.0
        %1097 = vmatpush1.msra.mxu0 0.0
        %1098 = vmatprep.subr.mxu0 0.0
        %1099 = vmatpush1.msra.mxu0 0.0
        %1100 = vmatprep.subr.mxu0 0.0
        %1101 = vmatpush1.msra.mxu0 0.0
        %1102 = vmatprep.subr.mxu0 0.0
        %1103 = vmatpush1.msra.mxu0 0.0
        %1104 = vmatprep.subr.mxu0 0.0
        %1105 = vmatpush1.msra.mxu0 0.0
        %1106 = vmatprep.subr.mxu0 0.0
        %1107 = vmatpush1.msra.mxu0 0.0
        %1108 = vmatprep.subr.mxu0 0.0
        %1109 = vmatpush1.msra.mxu0 0.0
        %1110 = vmatprep.subr.mxu0 0.0
        %1111 = vmatpush1.msra.mxu0 0.0
        %1112 = vmatprep.subr.mxu0 0.0
        %v1113 = vand.u32 %v687, 4294901760
        %1114 = vmatpush1.msra.mxu0 %v1113
        %1115 = vmatprep.subr.mxu0 0.0
        %v1116 = vand.u32 %v658, 4294901760
        %1117 = vmatpush1.msra.mxu0 %v1116
        %1118 = vmatprep.subr.mxu0 0.0
        %1119 = vmatpush2.msra.mxu0 0.0
        %1120 = vmatprep.subr.mxu0 0.0
        %1121 = vmatpush2.msra.mxu0 0.0
        %1122 = vmatprep.subr.mxu0 0.0
        %1123 = vmatpush2.msra.mxu0 0.0
        %1124 = vmatprep.subr.mxu0 0.0
        %1125 = vmatpush2.msra.mxu0 0.0
        %1126 = vmatprep.subr.mxu0 0.0
        %1127 = vmatpush2.msra.mxu0 0.0
        %1128 = vmatprep.subr.mxu0 0.0
        %1129 = vmatpush2.msra.mxu0 0.0
        %1130 = vmatprep.subr.mxu0 0.0
        %1131 = vmatpush2.msra.mxu0 0.0
        %1132 = vmatprep.subr.mxu0 0.0
        %1133 = vmatpush2.msra.mxu0 0.0
        %1134 = vmatprep.subr.mxu0 0.0
        %1135 = vmatpush2.msra.mxu0 0.0
        %1136 = vmatprep.subr.mxu0 0.0
        %1137 = vmatpush2.msra.mxu0 0.0
        %1138 = vmatprep.subr.mxu0 0.0
        %1139 = vmatpush2.msra.mxu0 0.0
        %1140 = vmatprep.subr.mxu0 0.0
        %1141 = vmatpush2.msra.mxu0 0.0
        %1142 = vmatprep.subr.mxu0 0.0
        %1143 = vmatpush2.msra.mxu0 0.0
        %1144 = vmatprep.subr.mxu0 0.0
        %1145 = vmatpush2.msra.mxu0 0.0
        %1146 = vmatprep.subr.mxu0 0.0
        %1147 = vmatpush2.msra.mxu0 0.0
        %1148 = vmatprep.subr.mxu0 0.0
        %1149 = vmatpush2.msra.mxu0 0.0
        %1150 = vmatprep.mubr.f32.mxu0 0.0
        %v1151 = vand.u32 %v662, 4294901760
        %v1152 = vsub.f32 %v662, %v1151
        %v1153 = vand.u32 %v1152, 4294901760
        %1154 = vmatmul.mubr.f32.gmra.mxu0 %v1153
        %v1155 = vpop.f32.mrf.mxu0
        %v1156 = vadd.f32 %v1032, %v1155
        %v1157 = vpop.f32.mrf.mxu0
        %1158 = vmatprep.mubr.f32.mxu0 0.0
        %v1159 = vand.u32 %v665, 4294901760
        %v1160 = vsub.f32 %v665, %v1159
        %v1161 = vand.u32 %v1160, 4294901760
        %1162 = vmatmul.mubr.f32.gmra.mxu0 %v1161
        %v1163 = vpop.f32.mrf.mxu0
        %v1164 = vadd.f32 %v1039, %v1163
        %v1165 = vpop.f32.mrf.mxu0
        %1166 = vmatprep.mubr.f32.mxu0 0.0
        %v1167 = vand.u32 %v668, 4294901760
        %v1168 = vsub.f32 %v668, %v1167
        %v1169 = vand.u32 %v1168, 4294901760
        %1170 = vmatmul.mubr.f32.gmra.mxu0 %v1169
        %v1171 = vpop.f32.mrf.mxu0
        %v1172 = vadd.f32 %v1046, %v1171
        %v1173 = vpop.f32.mrf.mxu0
        %1174 = vmatprep.mubr.f32.mxu0 0.0
        %v1175 = vand.u32 %v671, 4294901760
        %v1176 = vsub.f32 %v671, %v1175
        %v1177 = vand.u32 %v1176, 4294901760
        %1178 = vmatmul.mubr.f32.gmra.mxu0 %v1177
        %v1179 = vpop.f32.mrf.mxu0
        %v1180 = vadd.f32 %v1053, %v1179
        %v1181 = vpop.f32.mrf.mxu0
        %1182 = vmatprep.mubr.f32.mxu0 0.0
        %v1183 = vand.u32 %v674, 4294901760
        %v1184 = vsub.f32 %v674, %v1183
        %v1185 = vand.u32 %v1184, 4294901760
        %1186 = vmatmul.mubr.f32.gmra.mxu0 %v1185
        %v1187 = vpop.f32.mrf.mxu0
        %v1188 = vadd.f32 %v1060, %v1187
        %v1189 = vpop.f32.mrf.mxu0
        %1190 = vmatprep.mubr.f32.mxu0 0.0
        %v1191 = vand.u32 %v677, 4294901760
        %v1192 = vsub.f32 %v677, %v1191
        %v1193 = vand.u32 %v1192, 4294901760
        %1194 = vmatmul.mubr.f32.gmra.mxu0 %v1193
        %v1195 = vpop.f32.mrf.mxu0
        %v1196 = vadd.f32 %v1067, %v1195
        %v1197 = vpop.f32.mrf.mxu0
        %1198 = vmatprep.mubr.f32.mxu0 0.0
        %v1199 = vand.u32 %v680, 4294901760
        %v1200 = vsub.f32 %v680, %v1199
        %v1201 = vand.u32 %v1200, 4294901760
        %1202 = vmatmul.mubr.f32.gmra.mxu0 %v1201
        %v1203 = vpop.f32.mrf.mxu0
        %v1204 = vadd.f32 %v1074, %v1203
        %v1205 = vpop.f32.mrf.mxu0
        %1206 = vmatprep.mubr.f32.mxu0 0.0
        %v1207 = vand.u32 %v683, 4294901760
        %v1208 = vsub.f32 %v683, %v1207
        %v1209 = vand.u32 %v1208, 4294901760
        %1210 = vmatmul.mubr.f32.gmra.mxu0 %v1209
        %v1211 = vpop.f32.mrf.mxu0
        %v1212 = vadd.f32 %v1081, %v1211
        %v1213 = vpop.f32.mrf.mxu0
        %1214 = vdwg.mxu0
        %1215 = vmatprep.subr.mxu0 0.0
        %1216 = vmatpush1.msra.mxu0 0.0
        %1217 = vmatprep.subr.mxu0 0.0
        %1218 = vmatpush1.msra.mxu0 0.0
        %1219 = vmatprep.subr.mxu0 0.0
        %1220 = vmatpush1.msra.mxu0 0.0
        %1221 = vmatprep.subr.mxu0 0.0
        %1222 = vmatpush1.msra.mxu0 0.0
        %1223 = vmatprep.subr.mxu0 0.0
        %1224 = vmatpush1.msra.mxu0 0.0
        %1225 = vmatprep.subr.mxu0 0.0
        %1226 = vmatpush1.msra.mxu0 0.0
        %1227 = vmatprep.subr.mxu0 0.0
        %1228 = vmatpush1.msra.mxu0 0.0
        %1229 = vmatprep.subr.mxu0 0.0
        %1230 = vmatpush1.msra.mxu0 0.0
        %1231 = vmatprep.subr.mxu0 0.0
        %1232 = vmatpush1.msra.mxu0 0.0
        %1233 = vmatprep.subr.mxu0 0.0
        %1234 = vmatpush1.msra.mxu0 0.0
        %1235 = vmatprep.subr.mxu0 0.0
        %1236 = vmatpush1.msra.mxu0 0.0
        %1237 = vmatprep.subr.mxu0 0.0
        %1238 = vmatpush1.msra.mxu0 0.0
        %1239 = vmatprep.subr.mxu0 0.0
        %1240 = vmatpush1.msra.mxu0 0.0
        %1241 = vmatprep.subr.mxu0 0.0
        %1242 = vmatpush1.msra.mxu0 0.0
        %1243 = vmatprep.subr.mxu0 0.0
        %v1244 = vand.u32 %v687, 4294901760
        %v1245 = vsub.f32 %v687, %v1244
        %v1246 = vand.u32 %v1245, 4294901760
        %1247 = vmatpush1.msra.mxu0 %v1246
        %1248 = vmatprep.subr.mxu0 0.0
        %v1249 = vand.u32 %v658, 4294901760
        %v1250 = vsub.f32 %v658, %v1249
        %v1251 = vand.u32 %v1250, 4294901760
        %1252 = vmatpush1.msra.mxu0 %v1251
        %1253 = vmatprep.subr.mxu0 0.0
        %1254 = vmatpush2.msra.mxu0 0.0
        %1255 = vmatprep.subr.mxu0 0.0
        %1256 = vmatpush2.msra.mxu0 0.0
        %1257 = vmatprep.subr.mxu0 0.0
        %1258 = vmatpush2.msra.mxu0 0.0
        %1259 = vmatprep.subr.mxu0 0.0
        %1260 = vmatpush2.msra.mxu0 0.0
        %1261 = vmatprep.subr.mxu0 0.0
        %1262 = vmatpush2.msra.mxu0 0.0
        %1263 = vmatprep.subr.mxu0 0.0
        %1264 = vmatpush2.msra.mxu0 0.0
        %1265 = vmatprep.subr.mxu0 0.0
        %1266 = vmatpush2.msra.mxu0 0.0
        %1267 = vmatprep.subr.mxu0 0.0
        %1268 = vmatpush2.msra.mxu0 0.0
        %1269 = vmatprep.subr.mxu0 0.0
        %1270 = vmatpush2.msra.mxu0 0.0
        %1271 = vmatprep.subr.mxu0 0.0
        %1272 = vmatpush2.msra.mxu0 0.0
        %1273 = vmatprep.subr.mxu0 0.0
        %1274 = vmatpush2.msra.mxu0 0.0
        %1275 = vmatprep.subr.mxu0 0.0
        %1276 = vmatpush2.msra.mxu0 0.0
        %1277 = vmatprep.subr.mxu0 0.0
        %1278 = vmatpush2.msra.mxu0 0.0
        %1279 = vmatprep.subr.mxu0 0.0
        %1280 = vmatpush2.msra.mxu0 0.0
        %1281 = vmatprep.subr.mxu0 0.0
        %1282 = vmatpush2.msra.mxu0 0.0
        %1283 = vmatprep.subr.mxu0 0.0
        %1284 = vmatpush2.msra.mxu0 0.0
        %1285 = vmatprep.mubr.f32.mxu0 0.0
        %v1286 = vand.u32 %v662, 4294901760
        %1287 = vmatmul.mubr.f32.gmra.mxu0 %v1286
        %v1288 = vpop.f32.mrf.mxu0
        %v1289 = vadd.f32 %v1156, %v1288
        %v1290 = vpop.f32.mrf.mxu0
        %1291 = vmatprep.mubr.f32.mxu0 0.0
        %v1292 = vand.u32 %v665, 4294901760
        %1293 = vmatmul.mubr.f32.gmra.mxu0 %v1292
        %v1294 = vpop.f32.mrf.mxu0
        %v1295 = vadd.f32 %v1164, %v1294
        %v1296 = vpop.f32.mrf.mxu0
        %1297 = vmatprep.mubr.f32.mxu0 0.0
        %v1298 = vand.u32 %v668, 4294901760
        %1299 = vmatmul.mubr.f32.gmra.mxu0 %v1298
        %v1300 = vpop.f32.mrf.mxu0
        %v1301 = vadd.f32 %v1172, %v1300
        %v1302 = vpop.f32.mrf.mxu0
        %1303 = vmatprep.mubr.f32.mxu0 0.0
        %v1304 = vand.u32 %v671, 4294901760
        %1305 = vmatmul.mubr.f32.gmra.mxu0 %v1304
        %v1306 = vpop.f32.mrf.mxu0
        %v1307 = vadd.f32 %v1180, %v1306
        %v1308 = vpop.f32.mrf.mxu0
        %1309 = vmatprep.mubr.f32.mxu0 0.0
        %v1310 = vand.u32 %v674, 4294901760
        %1311 = vmatmul.mubr.f32.gmra.mxu0 %v1310
        %v1312 = vpop.f32.mrf.mxu0
        %v1313 = vadd.f32 %v1188, %v1312
        %v1314 = vpop.f32.mrf.mxu0
        %1315 = vmatprep.mubr.f32.mxu0 0.0
        %v1316 = vand.u32 %v677, 4294901760
        %1317 = vmatmul.mubr.f32.gmra.mxu0 %v1316
        %v1318 = vpop.f32.mrf.mxu0
        %v1319 = vadd.f32 %v1196, %v1318
        %v1320 = vpop.f32.mrf.mxu0
        %1321 = vmatprep.mubr.f32.mxu0 0.0
        %v1322 = vand.u32 %v680, 4294901760
        %1323 = vmatmul.mubr.f32.gmra.mxu0 %v1322
        %v1324 = vpop.f32.mrf.mxu0
        %v1325 = vadd.f32 %v1204, %v1324
        %v1326 = vpop.f32.mrf.mxu0
        %1327 = vmatprep.mubr.f32.mxu0 0.0
        %v1328 = vand.u32 %v683, 4294901760
        %1329 = vmatmul.mubr.f32.gmra.mxu0 %v1328
        %v1330 = vpop.f32.mrf.mxu0
        %v1331 = vadd.f32 %v1212, %v1330
        %v1332 = vpop.f32.mrf.mxu0
        %1333 = vdwg.mxu0
        %1334 = vmatprep.subr.mxu0 0.0
        %1335 = vmatpush1.msra.mxu0 0.0
        %1336 = vmatprep.subr.mxu0 0.0
        %1337 = vmatpush1.msra.mxu0 0.0
        %1338 = vmatprep.subr.mxu0 0.0
        %1339 = vmatpush1.msra.mxu0 0.0
        %1340 = vmatprep.subr.mxu0 0.0
        %1341 = vmatpush1.msra.mxu0 0.0
        %1342 = vmatprep.subr.mxu0 0.0
        %1343 = vmatpush1.msra.mxu0 0.0
        %1344 = vmatprep.subr.mxu0 0.0
        %1345 = vmatpush1.msra.mxu0 0.0
        %1346 = vmatprep.subr.mxu0 0.0
        %1347 = vmatpush1.msra.mxu0 0.0
        %1348 = vmatprep.subr.mxu0 0.0
        %1349 = vmatpush1.msra.mxu0 0.0
        %1350 = vmatprep.subr.mxu0 0.0
        %1351 = vmatpush1.msra.mxu0 0.0
        %1352 = vmatprep.subr.mxu0 0.0
        %1353 = vmatpush1.msra.mxu0 0.0
        %1354 = vmatprep.subr.mxu0 0.0
        %1355 = vmatpush1.msra.mxu0 0.0
        %1356 = vmatprep.subr.mxu0 0.0
        %1357 = vmatpush1.msra.mxu0 0.0
        %1358 = vmatprep.subr.mxu0 0.0
        %1359 = vmatpush1.msra.mxu0 0.0
        %1360 = vmatprep.subr.mxu0 0.0
        %1361 = vmatpush1.msra.mxu0 0.0
        %1362 = vmatprep.subr.mxu0 0.0
        %v1363 = vand.u32 %v687, 4294901760
        %1364 = vmatpush1.msra.mxu0 %v1363
        %1365 = vmatprep.subr.mxu0 0.0
        %v1366 = vand.u32 %v658, 4294901760
        %1367 = vmatpush1.msra.mxu0 %v1366
        %1368 = vmatprep.subr.mxu0 0.0
        %1369 = vmatpush2.msra.mxu0 0.0
        %1370 = vmatprep.subr.mxu0 0.0
        %1371 = vmatpush2.msra.mxu0 0.0
        %1372 = vmatprep.subr.mxu0 0.0
        %1373 = vmatpush2.msra.mxu0 0.0
        %1374 = vmatprep.subr.mxu0 0.0
        %1375 = vmatpush2.msra.mxu0 0.0
        %1376 = vmatprep.subr.mxu0 0.0
        %1377 = vmatpush2.msra.mxu0 0.0
        %1378 = vmatprep.subr.mxu0 0.0
        %1379 = vmatpush2.msra.mxu0 0.0
        %1380 = vmatprep.subr.mxu0 0.0
        %1381 = vmatpush2.msra.mxu0 0.0
        %1382 = vmatprep.subr.mxu0 0.0
        %1383 = vmatpush2.msra.mxu0 0.0
        %1384 = vmatprep.subr.mxu0 0.0
        %1385 = vmatpush2.msra.mxu0 0.0
        %1386 = vmatprep.subr.mxu0 0.0
        %1387 = vmatpush2.msra.mxu0 0.0
        %1388 = vmatprep.subr.mxu0 0.0
        %1389 = vmatpush2.msra.mxu0 0.0
        %1390 = vmatprep.subr.mxu0 0.0
        %1391 = vmatpush2.msra.mxu0 0.0
        %1392 = vmatprep.subr.mxu0 0.0
        %1393 = vmatpush2.msra.mxu0 0.0
        %1394 = vmatprep.subr.mxu0 0.0
        %1395 = vmatpush2.msra.mxu0 0.0
        %1396 = vmatprep.subr.mxu0 0.0
        %1397 = vmatpush2.msra.mxu0 0.0
        %1398 = vmatprep.subr.mxu0 0.0
        %1399 = vmatpush2.msra.mxu0 0.0
        %1400 = vmatprep.mubr.f32.mxu0 0.0
        %v1401 = vand.u32 %v662, 4294901760
        %1402 = vmatmul.mubr.f32.gmra.mxu0 %v1401
        %v1403 = vpop.f32.mrf.mxu0
        %v1404 = vadd.f32 %v1289, %v1403
        %v1405 = vpop.f32.mrf.mxu0
        %1406 = vmatprep.mubr.f32.mxu0 0.0
        %v1407 = vand.u32 %v665, 4294901760
        %1408 = vmatmul.mubr.f32.gmra.mxu0 %v1407
        %v1409 = vpop.f32.mrf.mxu0
        %v1410 = vadd.f32 %v1295, %v1409
        %v1411 = vpop.f32.mrf.mxu0
        %1412 = vmatprep.mubr.f32.mxu0 0.0
        %v1413 = vand.u32 %v668, 4294901760
        %1414 = vmatmul.mubr.f32.gmra.mxu0 %v1413
        %v1415 = vpop.f32.mrf.mxu0
        %v1416 = vadd.f32 %v1301, %v1415
        %v1417 = vpop.f32.mrf.mxu0
        %1418 = vmatprep.mubr.f32.mxu0 0.0
        %v1419 = vand.u32 %v671, 4294901760
        %1420 = vmatmul.mubr.f32.gmra.mxu0 %v1419
        %v1421 = vpop.f32.mrf.mxu0
        %v1422 = vadd.f32 %v1307, %v1421
        %v1423 = vpop.f32.mrf.mxu0
        %1424 = vmatprep.mubr.f32.mxu0 0.0
        %v1425 = vand.u32 %v674, 4294901760
        %1426 = vmatmul.mubr.f32.gmra.mxu0 %v1425
        %v1427 = vpop.f32.mrf.mxu0
        %v1428 = vadd.f32 %v1313, %v1427
        %v1429 = vpop.f32.mrf.mxu0
        %1430 = vmatprep.mubr.f32.mxu0 0.0
        %v1431 = vand.u32 %v677, 4294901760
        %1432 = vmatmul.mubr.f32.gmra.mxu0 %v1431
        %v1433 = vpop.f32.mrf.mxu0
        %v1434 = vadd.f32 %v1319, %v1433
        %v1435 = vpop.f32.mrf.mxu0
        %1436 = vmatprep.mubr.f32.mxu0 0.0
        %v1437 = vand.u32 %v680, 4294901760
        %1438 = vmatmul.mubr.f32.gmra.mxu0 %v1437
        %v1439 = vpop.f32.mrf.mxu0
        %v1440 = vadd.f32 %v1325, %v1439
        %v1441 = vpop.f32.mrf.mxu0
        %1442 = vmatprep.mubr.f32.mxu0 0.0
        %v1443 = vand.u32 %v683, 4294901760
        %1444 = vmatmul.mubr.f32.gmra.mxu0 %v1443
        %v1445 = vpop.f32.mrf.mxu0
        %v1446 = vadd.f32 %v1331, %v1445
        %v1447 = vpop.f32.mrf.mxu0
        %1448 = vdwg.mxu0
        %v1449 = vld [vmem:[%s509] sm:$0xff]
        %v1450 = vld [vmem:[%s509 + $0x8] sm:$0xff]
        %v1451 = vld [vmem:[%s509 + $0x10] sm:$0xff]
        %v1452 = vld [vmem:[%s509 + $0x18] sm:$0xff]
        %v1453 = vld [vmem:[%s509 + $0x20] sm:$0xff]
        %v1454 = vld [vmem:[%s509 + $0x28] sm:$0xff]
        %v1455 = vld [vmem:[%s509 + $0x30] sm:$0xff]
        %v1456 = vld [vmem:[%s509 + $0x38] sm:$0xff]
        %v1457 = vadd.f32 %v1449, %v1404
        %v1458 = vadd.f32 %v1450, %v1410
        %v1459 = vadd.f32 %v1451, %v1416
        %v1460 = vadd.f32 %v1452, %v1422
        %v1461 = vadd.f32 %v1453, %v1428
        %v1462 = vadd.f32 %v1454, %v1434
        %v1463 = vadd.f32 %v1455, %v1440
        %v1464 = vadd.f32 %v1456, %v1446
        %v1465 = vld [vmem:[%s7] sm:$0x1]
        %v1467 = vlaneseq
        %v1468 = vshrl.u32 %v1467, 7
        %v1469 = vsub.s32 0, %v1468
        %v1470 = vrot.slane %v1465, %v1469
        %v1472 = vadd.f32 %v1457, %v1470
        %v1473 = vadd.f32 %v1458, %v1470
        %v1474 = vadd.f32 %v1459, %v1470
        %v1475 = vadd.f32 %v1460, %v1470
        %v1476 = vadd.f32 %v1461, %v1470
        %v1477 = vadd.f32 %v1462, %v1470
        %v1478 = vadd.f32 %v1463, %v1470
        %v1479 = vadd.f32 %v1464, %v1470
        %v1480 = vld [vmem:[%s421] sm:$0xff]
        %v1481 = vld [vmem:[%s421 + $0x8] sm:$0xff]
        %v1482 = vld [vmem:[%s421 + $0x10] sm:$0xff]
        %v1483 = vld [vmem:[%s421 + $0x18] sm:$0xff]
        %v1484 = vld [vmem:[%s421 + $0x20] sm:$0xff]
        %v1485 = vld [vmem:[%s421 + $0x28] sm:$0xff]
        %v1486 = vld [vmem:[%s421 + $0x30] sm:$0xff]
        %v1487 = vld [vmem:[%s421 + $0x38] sm:$0xff]
        %vm1488 = vcmask 130048
        %v1489 = vsel %vm1488, %v1480, 0.0
        %1490 = vadd.xlane.f32.xlu0 %v1489
        %v1491 = vpop.xlane.xlu0 %1490
        %v1492 = vsel %vm1488, %v1481, 0.0
        %1493 = vadd.xlane.f32.xlu0 %v1492
        %v1494 = vpop.xlane.xlu0 %1493
        %v1495 = vsel %vm1488, %v1482, 0.0
        %1496 = vadd.xlane.f32.xlu0 %v1495
        %v1497 = vpop.xlane.xlu0 %1496
        %v1498 = vsel %vm1488, %v1483, 0.0
        %1499 = vadd.xlane.f32.xlu0 %v1498
        %v1500 = vpop.xlane.xlu0 %1499
        %v1501 = vsel %vm1488, %v1484, 0.0
        %1502 = vadd.xlane.f32.xlu0 %v1501
        %v1503 = vpop.xlane.xlu0 %1502
        %v1504 = vsel %vm1488, %v1485, 0.0
        %1505 = vadd.xlane.f32.xlu0 %v1504
        %v1506 = vpop.xlane.xlu0 %1505
        %v1507 = vsel %vm1488, %v1486, 0.0
        %1508 = vadd.xlane.f32.xlu0 %v1507
        %v1509 = vpop.xlane.xlu0 %1508
        %v1510 = vsel %vm1488, %v1487, 0.0
        %1511 = vadd.xlane.f32.xlu0 %v1510
        %v1512 = vpop.xlane.xlu0 %1511
        %v1513 = vrcp.pop 16.0
        %v1514 = vmul.f32 %v1491, %v1513
        %v1515 = vmul.f32 %v1494, %v1513
        %v1516 = vmul.f32 %v1497, %v1513
        %v1517 = vmul.f32 %v1500, %v1513
        %v1518 = vmul.f32 %v1503, %v1513
        %v1519 = vmul.f32 %v1506, %v1513
        %v1520 = vmul.f32 %v1509, %v1513
        %v1521 = vmul.f32 %v1512, %v1513
        %v1522 = vsub.f32 %v1480, %v1514
        %v1523 = vsub.f32 %v1481, %v1515
        %v1524 = vsub.f32 %v1482, %v1516
        %v1525 = vsub.f32 %v1483, %v1517
        %v1526 = vsub.f32 %v1484, %v1518
        %v1527 = vsub.f32 %v1485, %v1519
        %v1528 = vsub.f32 %v1486, %v1520
        %v1529 = vsub.f32 %v1487, %v1521
        %v1530 = vmul.f32 %v1522, %v1522
        %v1531 = vmul.f32 %v1523, %v1523
        %v1532 = vmul.f32 %v1524, %v1524
        %v1533 = vmul.f32 %v1525, %v1525
        %v1534 = vmul.f32 %v1526, %v1526
        %v1535 = vmul.f32 %v1527, %v1527
        %v1536 = vmul.f32 %v1528, %v1528
        %v1537 = vmul.f32 %v1529, %v1529
        %v1538 = vsel %vm1488, %v1530, 0.0
        %1539 = vadd.xlane.f32.xlu0 %v1538
        %v1540 = vpop.xlane.xlu0 %1539
        %v1541 = vsel %vm1488, %v1531, 0.0
        %1542 = vadd.xlane.f32.xlu0 %v1541
        %v1543 = vpop.xlane.xlu0 %1542
        %v1544 = vsel %vm1488, %v1532, 0.0
        %1545 = vadd.xlane.f32.xlu0 %v1544
        %v1546 = vpop.xlane.xlu0 %1545
        %v1547 = vsel %vm1488, %v1533, 0.0
        %1548 = vadd.xlane.f32.xlu0 %v1547
        %v1549 = vpop.xlane.xlu0 %1548
        %v1550 = vsel %vm1488, %v1534, 0.0
        %1551 = vadd.xlane.f32.xlu0 %v1550
        %v1552 = vpop.xlane.xlu0 %1551
        %v1553 = vsel %vm1488, %v1535, 0.0
        %1554 = vadd.xlane.f32.xlu0 %v1553
        %v1555 = vpop.xlane.xlu0 %1554
        %v1556 = vsel %vm1488, %v1536, 0.0
        %1557 = vadd.xlane.f32.xlu0 %v1556
        %v1558 = vpop.xlane.xlu0 %1557
        %v1559 = vsel %vm1488, %v1537, 0.0
        %1560 = vadd.xlane.f32.xlu0 %v1559
        %v1561 = vpop.xlane.xlu0 %1560
        %v1562 = vmul.f32 %v1540, %v1513
        %v1563 = vmul.f32 %v1543, %v1513
        %v1564 = vmul.f32 %v1546, %v1513
        %v1565 = vmul.f32 %v1549, %v1513
        %v1566 = vmul.f32 %v1552, %v1513
        %v1567 = vmul.f32 %v1555, %v1513
        %v1568 = vmul.f32 %v1558, %v1513
        %v1569 = vmul.f32 %v1561, %v1513
        %v1570 = vadd.f32 %v1562, 1e-05
        %v1571 = vadd.f32 %v1563, 1e-05
        %v1572 = vadd.f32 %v1564, 1e-05
        %v1573 = vadd.f32 %v1565, 1e-05
        %v1574 = vadd.f32 %v1566, 1e-05
        %v1575 = vadd.f32 %v1567, 1e-05
        %v1576 = vadd.f32 %v1568, 1e-05
        %v1577 = vadd.f32 %v1569, 1e-05
        %v1578 = vrsqrt.pop %v1570
        %v1579 = vrsqrt.pop %v1571
        %v1580 = vrsqrt.pop %v1572
        %v1581 = vrsqrt.pop %v1573
        %v1582 = vrsqrt.pop %v1574
        %v1583 = vrsqrt.pop %v1575
        %v1584 = vrsqrt.pop %v1576
        %v1585 = vrsqrt.pop %v1577
        %v1586 = vmul.f32 %v1522, %v1578
        %v1587 = vmul.f32 %v1523, %v1579
        %v1588 = vmul.f32 %v1524, %v1580
        %v1589 = vmul.f32 %v1525, %v1581
        %v1590 = vmul.f32 %v1526, %v1582
        %v1591 = vmul.f32 %v1527, %v1583
        %v1592 = vmul.f32 %v1528, %v1584
        %v1593 = vmul.f32 %v1529, %v1585
        %v1594 = vld [vmem:[%s8] sm:$0x1]
        %v1596 = vlaneseq
        %v1597 = vshrl.u32 %v1596, 7
        %v1598 = vsub.s32 0, %v1597
        %v1599 = vrot.slane %v1594, %v1598
        %v1601 = vmul.f32 %v1586, %v1599
        %v1602 = vmul.f32 %v1587, %v1599
        %v1603 = vmul.f32 %v1588, %v1599
        %v1604 = vmul.f32 %v1589, %v1599
        %v1605 = vmul.f32 %v1590, %v1599
        %v1606 = vmul.f32 %v1591, %v1599
        %v1607 = vmul.f32 %v1592, %v1599
        %v1608 = vmul.f32 %v1593, %v1599
        %v1609 = vadd.f32 %v1472, %v1601
        %v1610 = vadd.f32 %v1473, %v1602
        %v1611 = vadd.f32 %v1474, %v1603
        %v1612 = vadd.f32 %v1475, %v1604
        %v1613 = vadd.f32 %v1476, %v1605
        %v1614 = vadd.f32 %v1477, %v1606
        %v1615 = vadd.f32 %v1478, %v1607
        %v1616 = vadd.f32 %v1479, %v1608
        %v1617 = vld [vmem:[%s9] sm:$0x1]
        %v1619 = vlaneseq
        %v1620 = vshrl.u32 %v1619, 7
        %v1621 = vsub.s32 0, %v1620
        %v1622 = vrot.slane %v1617, %v1621
        %v1624 = vadd.f32 %v1609, %v1622
        %v1625 = vadd.f32 %v1610, %v1622
        %v1626 = vadd.f32 %v1611, %v1622
        %v1627 = vadd.f32 %v1612, %v1622
        %v1628 = vadd.f32 %v1613, %v1622
        %v1629 = vadd.f32 %v1614, %v1622
        %v1630 = vadd.f32 %v1615, %v1622
        %v1631 = vadd.f32 %v1616, %v1622
        %1632 = vst.msk [vmem:[%s483] sm:$0xff] %vm1488, %v1624
        %1633 = vst.msk [vmem:[%s483 + $0x8] sm:$0xff] %vm1488, %v1625
        %1634 = vst.msk [vmem:[%s483 + $0x10] sm:$0xff] %vm1488, %v1626
        %1635 = vst.msk [vmem:[%s483 + $0x18] sm:$0xff] %vm1488, %v1627
        %1636 = vst.msk [vmem:[%s483 + $0x20] sm:$0xff] %vm1488, %v1628
        %1637 = vst.msk [vmem:[%s483 + $0x28] sm:$0xff] %vm1488, %v1629
        %1638 = vst.msk [vmem:[%s483 + $0x30] sm:$0xff] %vm1488, %v1630
        %1639 = vst.msk [vmem:[%s483 + $0x38] sm:$0xff] %vm1488, %v1631
        %s1640 = sand.u32 %s300, 1
        %s1641 = scalar_lea.sflag [#allocation4], %s1640
        %s1642 = sand.u32 %s300, 1
        %s1643 = smul.addr %s1642, 64
        %s1644 = scalar_lea.vmem [#allocation5], %s1643
        // Predicated region
        $region65: #{recycling_embedder_forward.2} parent=59 // pred_check
          %p1645 = pneg %p310
        $region66: #{recycling_embedder_forward.2} parent=59 // pred_check_branch
          %1647 = sbr.rel (%p1645) target = $region68
        $region67: #{recycling_embedder_forward.2} parent=59 // pred_region
          %s1648 = smul.u32 8, %s33
          %s1650 = ssub.s32 1024, 1024
          %1651 = vsyncadd %s1641, %s1650
          %s1652 = sadd.s32 %s34, %s1648
          %s1653 = smul.addr %s32, 8
          %s1654 = sadd.s32 %s1652, %s1653
          %s1655 = smul.addr %s1654, 128
          %s1656 = scalar_lea.hbm %s10, %s1655
          %s1657 = sshll.u32 %s1644, 4
          %s1658 = int_to_ptr.vmem [resolvable:$true] %s1657
          %1663 = dma.vmem_to_hbm [thread:$0]  %s1658, 1024, %s1656, %s1641, 128, 128, 8
        $region68: #{recycling_embedder_forward.2} parent=59 // pred_fallthru
          _
      $region60: #{recycling_embedder_forward.2} parent=5 // pred_fallthru
        _
      %p1664 = scmp.le.s32.totalorder 2, %s22
      // Predicated region
      $region69: #{recycling_embedder_forward.2} parent=5 // pred_check
        %p1665 = pneg %p1664
      $region70: #{recycling_embedder_forward.2} parent=5 // pred_check_branch
        %1667 = sbr.rel (%p1665) target = $region72
      $region71: #{recycling_embedder_forward.2} parent=5 // pred_region
        %s1668 = ssub.s32 %s22, 2
        // Predicated region
        $region73: #{recycling_embedder_forward.2} parent=71 // pred_check
          %p1669 = pneg %p316
        $region74: #{recycling_embedder_forward.2} parent=71 // pred_check_branch
          %1671 = sbr.rel (%p1669) target = $region76
        $region75: #{recycling_embedder_forward.2} parent=71 // pred_region
          %s1672 = sand.u32 %s301, 1
          %s1673 = scalar_lea.sflag [#allocation4], %s1672
          %s1674 = sand.u32 %s301, 1
          %s1675 = smul.addr %s1674, 64
          %s1676 = scalar_lea.vmem [#allocation5], %s1675
          %1677 = dma.done %s1673, 1024
        $region76: #{recycling_embedder_forward.2} parent=71 // pred_fallthru
          _
      $region72: #{recycling_embedder_forward.2} parent=5 // pred_fallthru
        _
    $region6: #{recycling_embedder_forward.2} parent=1 // loop_footer
      %s26 = sadd.s32 1, %s22
    $region7: #{recycling_embedder_forward.2} parent=1 // loop_footer_branch
      %21 = sbr.rel target = $region3
    $region8: #{recycling_embedder_forward.2} parent=1 // loop_exit
      _
    %1678 = vsyncpa [#allocation3], 1
    %s1679 = scalar_lea.sflag [#allocation3], 1
    %1680 = vsyncpa %s1679, 1
    %1681 = vsyncpa [#allocation4], 1
    %s1682 = scalar_lea.sflag [#allocation4], 1
    %1683 = vsyncpa %s1682, 1

</llo_original>
